<compile_context>
chip_gen: v7x
topology: tpu7x:2x2x1
jax: 0.10.0
libtpu: 0.0.40
codegen_flags: <defaults>
</compile_context>

<pallas_src>
import functools

import jax
import jax.numpy as jnp
from jax import lax
from jax.experimental import pallas as pl
from jax.experimental.pallas import tpu as pltpu


# ----------------------------------------------------------------------------
# Pallas kernel: bidirectional 2-layer ReLU-RNN recurrence + compress MLP
# ----------------------------------------------------------------------------
def _encoder_kernel(
    x_ref,                               # (T*B, E) bf16, time-major rows (t*B + b)
    win0, bin0, whf0, whb0,              # layer 0: packed in-proj + per-dir W_hh
    win1, bin1, whf1, whb1,              # layer 1
    w1, b1, g1, be1, w2, b2, g2, be2,    # compress head
    out_ref,                             # (B, K) bf16
    seq0_ref,                            # scratch (T*B, 2H) bf16: [fwd | bwd] layer-0 outs
    *, T, B,
):
    H = whf0.shape[0]
    f32 = jnp.float32

    def cell(pre_in_f32, h_bf16, whh_val):
        # h_t = relu(precomputed_input_proj + h_{t-1} @ W_hh)   (biases pre-folded)
        pre = pre_in_f32 + jnp.dot(h_bf16, whh_val, preferred_element_type=f32)
        return jnp.maximum(pre, 0.0).astype(jnp.bfloat16)

    h0 = jnp.zeros((B, H), jnp.bfloat16)

    # ----- layer 0: hoisted, lane-dense input projection (bias folded once) -----
    proj0 = (jnp.dot(x_ref[...], win0[...], preferred_element_type=f32)
             + bin0[...].astype(f32))           # (T*B, 2H); [:, :H]=fwd, [:, H:]=bwd

    whf0v, whb0v = whf0[...], whb0[...]          # load recurrence weights once
    h_f, h_b = h0, h0
    # Fused fwd/bwd chains, fully unrolled (T static): two independent matmuls
    # per step keep the MXU result FIFO busy instead of 2*T serial waits.
    for i in range(T):
        r = T - 1 - i
        h_f = cell(proj0[i * B:(i + 1) * B, 0:H], h_f, whf0v)
        h_b = cell(proj0[r * B:(r + 1) * B, H:2 * H], h_b, whb0v)
        seq0_ref[i * B:(i + 1) * B, 0:H] = h_f          # layer-0 output at time i (fwd)
        seq0_ref[r * B:(r + 1) * B, H:2 * H] = h_b      # layer-0 output at time r (bwd)

    # ----- layer 1: hoisted input projection over the whole layer-0 output -----
    proj1 = (jnp.dot(seq0_ref[...], win1[...], preferred_element_type=f32)
             + bin1[...].astype(f32))           # (T*B, 2H)

    whf1v, whb1v = whf1[...], whb1[...]
    h_f, h_b = h0, h0
    for i in range(T):
        r = T - 1 - i
        h_f = cell(proj1[i * B:(i + 1) * B, 0:H], h_f, whf1v)
        h_b = cell(proj1[r * B:(r + 1) * B, H:2 * H], h_b, whb1v)

    # hidden[-1, fwd] ++ hidden[-1, bwd]  (order matches PyTorch layout)
    final = jnp.concatenate([h_f, h_b], axis=-1)        # (B, 2H) == (B, 4E)

    def layernorm(y, g_ref, b_ref, eps=1e-5):
        mu = jnp.mean(y, axis=-1, keepdims=True)
        var = jnp.mean((y - mu) ** 2, axis=-1, keepdims=True)
        yhat = (y - mu) * lax.rsqrt(var + eps)
        return yhat * g_ref[...].astype(f32) + b_ref[...].astype(f32)

    # ----- compress head (f32 math, bf16 at the boundaries; Dropout = id) -----
    y = jnp.dot(final, w1[...], preferred_element_type=f32) + b1[...].astype(f32)
    y = jnp.maximum(layernorm(y, g1, be1), 0.0).astype(jnp.bfloat16)
    z = jnp.dot(y, w2[...], preferred_element_type=f32) + b2[...].astype(f32)
    z = layernorm(z, g2, be2)

    out_ref[...] = z.astype(jnp.bfloat16)


# ----------------------------------------------------------------------------
# Wrapper: embedding gather + positional add (glue) + weight packing + pallas_call
# ----------------------------------------------------------------------------
@jax.jit
def rnn_hypertoken_encoder(x_ids, params):
    B, T = x_ids.shape
    E = params["embed"].shape[1]
    H = 2 * E
    K = params["w2"].shape[1]

    # Glue: gather + pos add, then time-major flatten -> kernel gets a single
    # lane-dense 2-D operand (row = t*B + b); no reshape/transpose in-kernel.
    positions = jnp.arange(T, dtype=jnp.int32)
    emb = params["embed"][x_ids] + params["pos_embed"][positions][None, :, :]   # (B,T,E) bf16
    x_flat = jnp.transpose(emb, (1, 0, 2)).reshape(T * B, E)                     # (T*B, E)

    # Pack per-direction input-projection weights/biases: lanes [:H]=fwd, [H:]=bwd.
    win0 = jnp.concatenate([params["wif0"], params["wib0"]], axis=1)   # (E, 2H)
    bin0 = jnp.concatenate([params["bf0"], params["bb0"]], axis=1)     # (1, 2H)
    win1 = jnp.concatenate([params["wif1"], params["wib1"]], axis=1)   # (2H, 2H)
    bin1 = jnp.concatenate([params["bf1"], params["bb1"]], axis=1)     # (1, 2H)

    weights = [
        win0, bin0, params["whf0"], params["whb0"],
        win1, bin1, params["whf1"], params["whb1"],
        params["w1"], params["b1"], params["g1"], params["be1"],
        params["w2"], params["b2"], params["g2"], params["be2"],
    ]
    n_in = 1 + len(weights)

    # NOTE: for large B this kernel could additionally be split across the two
    # v7x TensorCores via a batch grid / core_map; at the tiny demo batch a
    # single program is the fastest configuration on all generations.
    kernel = functools.partial(_encoder_kernel, T=T, B=B)
    return pl.pallas_call(
        kernel,
        out_shape=jax.ShapeDtypeStruct((B, K), jnp.bfloat16),
        in_specs=[pl.BlockSpec(memory_space=pltpu.MemorySpace.VMEM)] * n_in,
        out_specs=pl.BlockSpec(memory_space=pltpu.MemorySpace.VMEM),
        scratch_shapes=[pltpu.VMEM((T * B, 2 * H), jnp.bfloat16)],
    )(x_flat, *weights)


# ----------------------------------------------------------------------------
# Deterministic parameter construction (synthetic; matches module's shapes)
# ----------------------------------------------------------------------------
def make_params(key, vocab_size, token_len, embed_dim, hypertoken_size):
    E = embed_dim
    H = 2 * E
    K = hypertoken_size
    keys = jax.random.split(key, 32)
    ki = iter(keys)

    def rnd(shape, scale=0.05):
        return (scale * jax.random.normal(next(ki), shape, jnp.float32)).astype(jnp.bfloat16)

    p = {
        "embed": rnd((vocab_size, E), 1.0),
        "pos_embed": rnd((token_len, E), 1.0),
    }
    # RNN layer 0 (input E), layer 1 (input 2H). Weights stored transposed so the
    # kernel computes x @ W. Biases b_ih + b_hh are pre-summed.
    for layer, in_dim in ((0, E), (1, 2 * H)):
        for tag in ("f", "b"):
            p[f"wi{tag}{layer}"] = rnd((in_dim, H))
            p[f"wh{tag}{layer}"] = rnd((H, H))
            p[f"b{tag}{layer}"] = rnd((1, H))
    # compress head: Linear(4E=2H -> 2K), LN, ReLU, Linear(2K -> K), LN
    p["w1"] = rnd((2 * H, 2 * K))
    p["b1"] = rnd((1, 2 * K))
    p["g1"] = jnp.ones((1, 2 * K), jnp.bfloat16)
    p["be1"] = jnp.zeros((1, 2 * K), jnp.bfloat16)
    p["w2"] = rnd((2 * K, K))
    p["b2"] = rnd((1, K))
    p["g2"] = jnp.ones((1, K), jnp.bfloat16)
    p["be2"] = jnp.zeros((1, K), jnp.bfloat16)
    return p


# ----------------------------------------------------------------------------
# Pure-JAX reference (same math, for a sanity check)
# ----------------------------------------------------------------------------
def reference(x_ids, params):
    B, T = x_ids.shape
    E = params["embed"].shape[1]
    H = 2 * E
    emb = params["embed"][x_ids] + params["pos_embed"][jnp.arange(T)][None]
    x = jnp.transpose(emb, (1, 0, 2))  # (T,B,E)

    def cell(xt, h, wi, wh, b):
        pre = (xt.astype(jnp.float32) @ wi.astype(jnp.float32)
               + h.astype(jnp.float32) @ wh.astype(jnp.float32)
               + b.astype(jnp.float32))
        return jnp.maximum(pre, 0.0).astype(jnp.bfloat16)

    def run_dir(seq, wi, wh, b, reverse):
        ts = range(seq.shape[0] - 1, -1, -1) if reverse else range(seq.shape[0])
        h = jnp.zeros((B, H), jnp.bfloat16)
        outs = [None] * seq.shape[0]
        for t in ts:
            h = cell(seq[t], h, wi, wh, b)
            outs[t] = h
        return jnp.stack(outs, 0), h

    of, _ = run_dir(x, params["wif0"], params["whf0"], params["bf0"], False)
    ob, _ = run_dir(x, params["wib0"], params["whb0"], params["bb0"], True)
    l0 = jnp.concatenate([of, ob], axis=-1)
    _, h1f = run_dir(l0, params["wif1"], params["whf1"], params["bf1"], False)
    _, h1b = run_dir(l0, params["wib1"], params["whb1"], params["bb1"], True)
    final = jnp.concatenate([h1f, h1b], axis=-1)

    def ln(y, g, b):
        mu = jnp.mean(y, -1, keepdims=True)
        var = jnp.mean((y - mu) ** 2, -1, keepdims=True)
        return (y - mu) / jnp.sqrt(var + 1e-5) * g.astype(jnp.float32) + b.astype(jnp.float32)

    y = final.astype(jnp.float32) @ params["w1"].astype(jnp.float32) + params["b1"].astype(jnp.float32)
    y = jnp.maximum(ln(y, params["g1"], params["be1"]), 0.0).astype(jnp.bfloat16)
    z = y.astype(jnp.float32) @ params["w2"].astype(jnp.float32) + params["b2"].astype(jnp.float32)
    z = ln(z, params["g2"], params["be2"])
    return z.astype(jnp.bfloat16)


if __name__ == "__main__":
    # Small shapes consistent with the module's forward.
    VOCAB, TOKEN_LEN, EMBED_DIM, HYPERTOKEN, BATCH = 32, 8, 32, 32, 2

    key = jax.random.PRNGKey(0)
    k_param, k_ids = jax.random.split(key)
    params = make_params(k_param, VOCAB, TOKEN_LEN, EMBED_DIM, HYPERTOKEN)
    x_ids = jax.random.randint(k_ids, (BATCH, TOKEN_LEN), 0, VOCAB, dtype=jnp.int32)

    out = rnn_hypertoken_encoder(x_ids, params)
    out = jax.block_until_ready(out)
    assert out.shape == (BATCH, HYPERTOKEN) and out.dtype == jnp.bfloat16

    ref = reference(x_ids, params)
    err = jnp.max(jnp.abs(out.astype(jnp.float32) - ref.astype(jnp.float32)))
    assert jnp.isfinite(err) and err < 5e-2, f"mismatch vs reference: {err}"

    print("KERNEL_OK")
</pallas_src>

<mosaic_0001>
module attributes {stable_mosaic.version = 11 : i64} {
  func.func @_encoder_kernel(%arg0: memref<16x32xbf16, #tpu.memory_space<vmem>>, %arg1: memref<32x128xbf16, #tpu.memory_space<vmem>>, %arg2: memref<1x128xbf16, #tpu.memory_space<vmem>>, %arg3: memref<64x64xbf16, #tpu.memory_space<vmem>>, %arg4: memref<64x64xbf16, #tpu.memory_space<vmem>>, %arg5: memref<128x128xbf16, #tpu.memory_space<vmem>>, %arg6: memref<1x128xbf16, #tpu.memory_space<vmem>>, %arg7: memref<64x64xbf16, #tpu.memory_space<vmem>>, %arg8: memref<64x64xbf16, #tpu.memory_space<vmem>>, %arg9: memref<128x64xbf16, #tpu.memory_space<vmem>>, %arg10: memref<1x64xbf16, #tpu.memory_space<vmem>>, %arg11: memref<1x64xbf16, #tpu.memory_space<vmem>>, %arg12: memref<1x64xbf16, #tpu.memory_space<vmem>>, %arg13: memref<64x32xbf16, #tpu.memory_space<vmem>>, %arg14: memref<1x32xbf16, #tpu.memory_space<vmem>>, %arg15: memref<1x32xbf16, #tpu.memory_space<vmem>>, %arg16: memref<1x32xbf16, #tpu.memory_space<vmem>>, %arg17: memref<2x32xbf16, #tpu.memory_space<vmem>>, %arg18: memref<16x128xbf16, #tpu.memory_space<vmem>>) attributes {dimension_semantics = [], scalar_prefetch = 0 : i64, scratch_operands = 1 : i64, tpu.core_type = #tpu.core_type<tc>} {
    %cst = arith.constant 0.000000e+00 : bf16
    %0 = vector.broadcast %cst : bf16 to vector<2x64xbf16>
    %c0 = arith.constant 0 : index
    %c0_0 = arith.constant 0 : index
    %1 = vector.load %arg0[%c0, %c0_0] : memref<16x32xbf16, #tpu.memory_space<vmem>>, vector<16x32xbf16>
    %c0_1 = arith.constant 0 : index
    %c0_2 = arith.constant 0 : index
    %2 = vector.load %arg1[%c0_1, %c0_2] : memref<32x128xbf16, #tpu.memory_space<vmem>>, vector<32x128xbf16>
    %cst_3 = arith.constant dense<0.000000e+00> : vector<16x128xf32>
    %3 = tpu.matmul %1, %2, %cst_3 {dimension_numbers = #tpu.dot_dimension_numbers<[1], [0], [0], [1], [0, 0, 1, 1], [], []>} : vector<16x32xbf16>, vector<32x128xbf16>, vector<16x128xf32> -> vector<16x128xf32>
    %c0_4 = arith.constant 0 : index
    %c0_5 = arith.constant 0 : index
    %4 = vector.load %arg2[%c0_4, %c0_5] : memref<1x128xbf16, #tpu.memory_space<vmem>>, vector<1x128xbf16>
    %5 = arith.extf %4 : vector<1x128xbf16> to vector<1x128xf32>
    %6 = vector.broadcast %5 : vector<1x128xf32> to vector<16x128xf32>
    %7 = arith.addf %3, %6 : vector<16x128xf32>
    %c0_6 = arith.constant 0 : index
    %c0_7 = arith.constant 0 : index
    %8 = vector.load %arg3[%c0_6, %c0_7] : memref<64x64xbf16, #tpu.memory_space<vmem>>, vector<64x64xbf16>
    %c0_8 = arith.constant 0 : index
    %c0_9 = arith.constant 0 : index
    %9 = vector.load %arg4[%c0_8, %c0_9] : memref<64x64xbf16, #tpu.memory_space<vmem>>, vector<64x64xbf16>
    %10 = vector.extract_strided_slice %7 {offsets = [0, 0], sizes = [2, 64], strides = [1, 1]} : vector<16x128xf32> to vector<2x64xf32>
    %cst_10 = arith.constant dense<0.000000e+00> : vector<2x64xf32>
    %11 = tpu.matmul %0, %8, %cst_10 {dimension_numbers = #tpu.dot_dimension_numbers<[1], [0], [0], [1], [0, 0, 1, 1], [], []>} : vector<2x64xbf16>, vector<64x64xbf16>, vector<2x64xf32> -> vector<2x64xf32>
    %12 = arith.addf %10, %11 : vector<2x64xf32>
    %cst_11 = arith.constant 0.000000e+00 : f32
    %13 = vector.broadcast %cst_11 : f32 to vector<2x64xf32>
    %14 = arith.maximumf %12, %13 : vector<2x64xf32>
    %15 = arith.truncf %14 : vector<2x64xf32> to vector<2x64xbf16>
    %16 = vector.extract_strided_slice %7 {offsets = [14, 64], sizes = [2, 64], strides = [1, 1]} : vector<16x128xf32> to vector<2x64xf32>
    %cst_12 = arith.constant dense<0.000000e+00> : vector<2x64xf32>
    %17 = tpu.matmul %0, %9, %cst_12 {dimension_numbers = #tpu.dot_dimension_numbers<[1], [0], [0], [1], [0, 0, 1, 1], [], []>} : vector<2x64xbf16>, vector<64x64xbf16>, vector<2x64xf32> -> vector<2x64xf32>
    %18 = arith.addf %16, %17 : vector<2x64xf32>
    %cst_13 = arith.constant 0.000000e+00 : f32
    %19 = vector.broadcast %cst_13 : f32 to vector<2x64xf32>
    %20 = arith.maximumf %18, %19 : vector<2x64xf32>
    %21 = arith.truncf %20 : vector<2x64xf32> to vector<2x64xbf16>
    %c0_14 = arith.constant 0 : index
    %c0_15 = arith.constant 0 : index
    %22 = vector.load %arg18[%c0_14, %c0_15] : memref<16x128xbf16, #tpu.memory_space<vmem>>, vector<2x64xbf16>
    tpu.vector_store %arg18[%c0_14, %c0_15], %15 {strides = array<i32>} : memref<16x128xbf16, #tpu.memory_space<vmem>>, vector<2x64xbf16>,
    %c14 = arith.constant 14 : index
    %c64 = arith.constant 64 : index
    %23 = vector.load %arg18[%c14, %c64] : memref<16x128xbf16, #tpu.memory_space<vmem>>, vector<2x64xbf16>
    tpu.vector_store %arg18[%c14, %c64], %21 {strides = array<i32>} : memref<16x128xbf16, #tpu.memory_space<vmem>>, vector<2x64xbf16>,
    %24 = vector.extract_strided_slice %7 {offsets = [2, 0], sizes = [2, 64], strides = [1, 1]} : vector<16x128xf32> to vector<2x64xf32>
    %cst_16 = arith.constant dense<0.000000e+00> : vector<2x64xf32>
    %25 = tpu.matmul %15, %8, %cst_16 {dimension_numbers = #tpu.dot_dimension_numbers<[1], [0], [0], [1], [0, 0, 1, 1], [], []>} : vector<2x64xbf16>, vector<64x64xbf16>, vector<2x64xf32> -> vector<2x64xf32>
    %26 = arith.addf %24, %25 : vector<2x64xf32>
    %cst_17 = arith.constant 0.000000e+00 : f32
    %27 = vector.broadcast %cst_17 : f32 to vector<2x64xf32>
    %28 = arith.maximumf %26, %27 : vector<2x64xf32>
    %29 = arith.truncf %28 : vector<2x64xf32> to vector<2x64xbf16>
    %30 = vector.extract_strided_slice %7 {offsets = [12, 64], sizes = [2, 64], strides = [1, 1]} : vector<16x128xf32> to vector<2x64xf32>
    %cst_18 = arith.constant dense<0.000000e+00> : vector<2x64xf32>
    %31 = tpu.matmul %21, %9, %cst_18 {dimension_numbers = #tpu.dot_dimension_numbers<[1], [0], [0], [1], [0, 0, 1, 1], [], []>} : vector<2x64xbf16>, vector<64x64xbf16>, vector<2x64xf32> -> vector<2x64xf32>
    %32 = arith.addf %30, %31 : vector<2x64xf32>
    %cst_19 = arith.constant 0.000000e+00 : f32
    %33 = vector.broadcast %cst_19 : f32 to vector<2x64xf32>
    %34 = arith.maximumf %32, %33 : vector<2x64xf32>
    %35 = arith.truncf %34 : vector<2x64xf32> to vector<2x64xbf16>
    %c2 = arith.constant 2 : index
    %c0_20 = arith.constant 0 : index
    %36 = vector.load %arg18[%c2, %c0_20] : memref<16x128xbf16, #tpu.memory_space<vmem>>, vector<2x64xbf16>
    tpu.vector_store %arg18[%c2, %c0_20], %29 {strides = array<i32>} : memref<16x128xbf16, #tpu.memory_space<vmem>>, vector<2x64xbf16>,
    %c12 = arith.constant 12 : index
    %c64_21 = arith.constant 64 : index
    %37 = vector.load %arg18[%c12, %c64_21] : memref<16x128xbf16, #tpu.memory_space<vmem>>, vector<2x64xbf16>
    tpu.vector_store %arg18[%c12, %c64_21], %35 {strides = array<i32>} : memref<16x128xbf16, #tpu.memory_space<vmem>>, vector<2x64xbf16>,
    %38 = vector.extract_strided_slice %7 {offsets = [4, 0], sizes = [2, 64], strides = [1, 1]} : vector<16x128xf32> to vector<2x64xf32>
    %cst_22 = arith.constant dense<0.000000e+00> : vector<2x64xf32>
    %39 = tpu.matmul %29, %8, %cst_22 {dimension_numbers = #tpu.dot_dimension_numbers<[1], [0], [0], [1], [0, 0, 1, 1], [], []>} : vector<2x64xbf16>, vector<64x64xbf16>, vector<2x64xf32> -> vector<2x64xf32>
    %40 = arith.addf %38, %39 : vector<2x64xf32>
    %cst_23 = arith.constant 0.000000e+00 : f32
    %41 = vector.broadcast %cst_23 : f32 to vector<2x64xf32>
    %42 = arith.maximumf %40, %41 : vector<2x64xf32>
    %43 = arith.truncf %42 : vector<2x64xf32> to vector<2x64xbf16>
    %44 = vector.extract_strided_slice %7 {offsets = [10, 64], sizes = [2, 64], strides = [1, 1]} : vector<16x128xf32> to vector<2x64xf32>
    %cst_24 = arith.constant dense<0.000000e+00> : vector<2x64xf32>
    %45 = tpu.matmul %35, %9, %cst_24 {dimension_numbers = #tpu.dot_dimension_numbers<[1], [0], [0], [1], [0, 0, 1, 1], [], []>} : vector<2x64xbf16>, vector<64x64xbf16>, vector<2x64xf32> -> vector<2x64xf32>
    %46 = arith.addf %44, %45 : vector<2x64xf32>
    %cst_25 = arith.constant 0.000000e+00 : f32
    %47 = vector.broadcast %cst_25 : f32 to vector<2x64xf32>
    %48 = arith.maximumf %46, %47 : vector<2x64xf32>
    %49 = arith.truncf %48 : vector<2x64xf32> to vector<2x64xbf16>
    %c4 = arith.constant 4 : index
    %c0_26 = arith.constant 0 : index
    %50 = vector.load %arg18[%c4, %c0_26] : memref<16x128xbf16, #tpu.memory_space<vmem>>, vector<2x64xbf16>
    tpu.vector_store %arg18[%c4, %c0_26], %43 {strides = array<i32>} : memref<16x128xbf16, #tpu.memory_space<vmem>>, vector<2x64xbf16>,
    %c10 = arith.constant 10 : index
    %c64_27 = arith.constant 64 : index
    %51 = vector.load %arg18[%c10, %c64_27] : memref<16x128xbf16, #tpu.memory_space<vmem>>, vector<2x64xbf16>
    tpu.vector_store %arg18[%c10, %c64_27], %49 {strides = array<i32>} : memref<16x128xbf16, #tpu.memory_space<vmem>>, vector<2x64xbf16>,
    %52 = vector.extract_strided_slice %7 {offsets = [6, 0], sizes = [2, 64], strides = [1, 1]} : vector<16x128xf32> to vector<2x64xf32>
    %cst_28 = arith.constant dense<0.000000e+00> : vector<2x64xf32>
    %53 = tpu.matmul %43, %8, %cst_28 {dimension_numbers = #tpu.dot_dimension_numbers<[1], [0], [0], [1], [0, 0, 1, 1], [], []>} : vector<2x64xbf16>, vector<64x64xbf16>, vector<2x64xf32> -> vector<2x64xf32>
    %54 = arith.addf %52, %53 : vector<2x64xf32>
    %cst_29 = arith.constant 0.000000e+00 : f32
    %55 = vector.broadcast %cst_29 : f32 to vector<2x64xf32>
    %56 = arith.maximumf %54, %55 : vector<2x64xf32>
    %57 = arith.truncf %56 : vector<2x64xf32> to vector<2x64xbf16>
    %58 = vector.extract_strided_slice %7 {offsets = [8, 64], sizes = [2, 64], strides = [1, 1]} : vector<16x128xf32> to vector<2x64xf32>
    %cst_30 = arith.constant dense<0.000000e+00> : vector<2x64xf32>
    %59 = tpu.matmul %49, %9, %cst_30 {dimension_numbers = #tpu.dot_dimension_numbers<[1], [0], [0], [1], [0, 0, 1, 1], [], []>} : vector<2x64xbf16>, vector<64x64xbf16>, vector<2x64xf32> -> vector<2x64xf32>
    %60 = arith.addf %58, %59 : vector<2x64xf32>
    %cst_31 = arith.constant 0.000000e+00 : f32
    %61 = vector.broadcast %cst_31 : f32 to vector<2x64xf32>
    %62 = arith.maximumf %60, %61 : vector<2x64xf32>
    %63 = arith.truncf %62 : vector<2x64xf32> to vector<2x64xbf16>
    %c6 = arith.constant 6 : index
    %c0_32 = arith.constant 0 : index
    %64 = vector.load %arg18[%c6, %c0_32] : memref<16x128xbf16, #tpu.memory_space<vmem>>, vector<2x64xbf16>
    tpu.vector_store %arg18[%c6, %c0_32], %57 {strides = array<i32>} : memref<16x128xbf16, #tpu.memory_space<vmem>>, vector<2x64xbf16>,
    %c8 = arith.constant 8 : index
    %c64_33 = arith.constant 64 : index
    %65 = vector.load %arg18[%c8, %c64_33] : memref<16x128xbf16, #tpu.memory_space<vmem>>, vector<2x64xbf16>
    tpu.vector_store %arg18[%c8, %c64_33], %63 {strides = array<i32>} : memref<16x128xbf16, #tpu.memory_space<vmem>>, vector<2x64xbf16>,
    %66 = vector.extract_strided_slice %7 {offsets = [8, 0], sizes = [2, 64], strides = [1, 1]} : vector<16x128xf32> to vector<2x64xf32>
    %cst_34 = arith.constant dense<0.000000e+00> : vector<2x64xf32>
    %67 = tpu.matmul %57, %8, %cst_34 {dimension_numbers = #tpu.dot_dimension_numbers<[1], [0], [0], [1], [0, 0, 1, 1], [], []>} : vector<2x64xbf16>, vector<64x64xbf16>, vector<2x64xf32> -> vector<2x64xf32>
    %68 = arith.addf %66, %67 : vector<2x64xf32>
    %cst_35 = arith.constant 0.000000e+00 : f32
    %69 = vector.broadcast %cst_35 : f32 to vector<2x64xf32>
    %70 = arith.maximumf %68, %69 : vector<2x64xf32>
    %71 = arith.truncf %70 : vector<2x64xf32> to vector<2x64xbf16>
    %72 = vector.extract_strided_slice %7 {offsets = [6, 64], sizes = [2, 64], strides = [1, 1]} : vector<16x128xf32> to vector<2x64xf32>
    %cst_36 = arith.constant dense<0.000000e+00> : vector<2x64xf32>
    %73 = tpu.matmul %63, %9, %cst_36 {dimension_numbers = #tpu.dot_dimension_numbers<[1], [0], [0], [1], [0, 0, 1, 1], [], []>} : vector<2x64xbf16>, vector<64x64xbf16>, vector<2x64xf32> -> vector<2x64xf32>
    %74 = arith.addf %72, %73 : vector<2x64xf32>
    %cst_37 = arith.constant 0.000000e+00 : f32
    %75 = vector.broadcast %cst_37 : f32 to vector<2x64xf32>
    %76 = arith.maximumf %74, %75 : vector<2x64xf32>
    %77 = arith.truncf %76 : vector<2x64xf32> to vector<2x64xbf16>
    %c8_38 = arith.constant 8 : index
    %c0_39 = arith.constant 0 : index
    %78 = vector.load %arg18[%c8_38, %c0_39] : memref<16x128xbf16, #tpu.memory_space<vmem>>, vector<2x64xbf16>
    tpu.vector_store %arg18[%c8_38, %c0_39], %71 {strides = array<i32>} : memref<16x128xbf16, #tpu.memory_space<vmem>>, vector<2x64xbf16>,
    %c6_40 = arith.constant 6 : index
    %c64_41 = arith.constant 64 : index
    %79 = vector.load %arg18[%c6_40, %c64_41] : memref<16x128xbf16, #tpu.memory_space<vmem>>, vector<2x64xbf16>
    tpu.vector_store %arg18[%c6_40, %c64_41], %77 {strides = array<i32>} : memref<16x128xbf16, #tpu.memory_space<vmem>>, vector<2x64xbf16>,
    %80 = vector.extract_strided_slice %7 {offsets = [10, 0], sizes = [2, 64], strides = [1, 1]} : vector<16x128xf32> to vector<2x64xf32>
    %cst_42 = arith.constant dense<0.000000e+00> : vector<2x64xf32>
    %81 = tpu.matmul %71, %8, %cst_42 {dimension_numbers = #tpu.dot_dimension_numbers<[1], [0], [0], [1], [0, 0, 1, 1], [], []>} : vector<2x64xbf16>, vector<64x64xbf16>, vector<2x64xf32> -> vector<2x64xf32>
    %82 = arith.addf %80, %81 : vector<2x64xf32>
    %cst_43 = arith.constant 0.000000e+00 : f32
    %83 = vector.broadcast %cst_43 : f32 to vector<2x64xf32>
    %84 = arith.maximumf %82, %83 : vector<2x64xf32>
    %85 = arith.truncf %84 : vector<2x64xf32> to vector<2x64xbf16>
    %86 = vector.extract_strided_slice %7 {offsets = [4, 64], sizes = [2, 64], strides = [1, 1]} : vector<16x128xf32> to vector<2x64xf32>
    %cst_44 = arith.constant dense<0.000000e+00> : vector<2x64xf32>
    %87 = tpu.matmul %77, %9, %cst_44 {dimension_numbers = #tpu.dot_dimension_numbers<[1], [0], [0], [1], [0, 0, 1, 1], [], []>} : vector<2x64xbf16>, vector<64x64xbf16>, vector<2x64xf32> -> vector<2x64xf32>
    %88 = arith.addf %86, %87 : vector<2x64xf32>
    %cst_45 = arith.constant 0.000000e+00 : f32
    %89 = vector.broadcast %cst_45 : f32 to vector<2x64xf32>
    %90 = arith.maximumf %88, %89 : vector<2x64xf32>
    %91 = arith.truncf %90 : vector<2x64xf32> to vector<2x64xbf16>
    %c10_46 = arith.constant 10 : index
    %c0_47 = arith.constant 0 : index
    %92 = vector.load %arg18[%c10_46, %c0_47] : memref<16x128xbf16, #tpu.memory_space<vmem>>, vector<2x64xbf16>
    tpu.vector_store %arg18[%c10_46, %c0_47], %85 {strides = array<i32>} : memref<16x128xbf16, #tpu.memory_space<vmem>>, vector<2x64xbf16>,
    %c4_48 = arith.constant 4 : index
    %c64_49 = arith.constant 64 : index
    %93 = vector.load %arg18[%c4_48, %c64_49] : memref<16x128xbf16, #tpu.memory_space<vmem>>, vector<2x64xbf16>
    tpu.vector_store %arg18[%c4_48, %c64_49], %91 {strides = array<i32>} : memref<16x128xbf16, #tpu.memory_space<vmem>>, vector<2x64xbf16>,
    %94 = vector.extract_strided_slice %7 {offsets = [12, 0], sizes = [2, 64], strides = [1, 1]} : vector<16x128xf32> to vector<2x64xf32>
    %cst_50 = arith.constant dense<0.000000e+00> : vector<2x64xf32>
    %95 = tpu.matmul %85, %8, %cst_50 {dimension_numbers = #tpu.dot_dimension_numbers<[1], [0], [0], [1], [0, 0, 1, 1], [], []>} : vector<2x64xbf16>, vector<64x64xbf16>, vector<2x64xf32> -> vector<2x64xf32>
    %96 = arith.addf %94, %95 : vector<2x64xf32>
    %cst_51 = arith.constant 0.000000e+00 : f32
    %97 = vector.broadcast %cst_51 : f32 to vector<2x64xf32>
    %98 = arith.maximumf %96, %97 : vector<2x64xf32>
    %99 = arith.truncf %98 : vector<2x64xf32> to vector<2x64xbf16>
    %100 = vector.extract_strided_slice %7 {offsets = [2, 64], sizes = [2, 64], strides = [1, 1]} : vector<16x128xf32> to vector<2x64xf32>
    %cst_52 = arith.constant dense<0.000000e+00> : vector<2x64xf32>
    %101 = tpu.matmul %91, %9, %cst_52 {dimension_numbers = #tpu.dot_dimension_numbers<[1], [0], [0], [1], [0, 0, 1, 1], [], []>} : vector<2x64xbf16>, vector<64x64xbf16>, vector<2x64xf32> -> vector<2x64xf32>
    %102 = arith.addf %100, %101 : vector<2x64xf32>
    %cst_53 = arith.constant 0.000000e+00 : f32
    %103 = vector.broadcast %cst_53 : f32 to vector<2x64xf32>
    %104 = arith.maximumf %102, %103 : vector<2x64xf32>
    %105 = arith.truncf %104 : vector<2x64xf32> to vector<2x64xbf16>
    %c12_54 = arith.constant 12 : index
    %c0_55 = arith.constant 0 : index
    %106 = vector.load %arg18[%c12_54, %c0_55] : memref<16x128xbf16, #tpu.memory_space<vmem>>, vector<2x64xbf16>
    tpu.vector_store %arg18[%c12_54, %c0_55], %99 {strides = array<i32>} : memref<16x128xbf16, #tpu.memory_space<vmem>>, vector<2x64xbf16>,
    %c2_56 = arith.constant 2 : index
    %c64_57 = arith.constant 64 : index
    %107 = vector.load %arg18[%c2_56, %c64_57] : memref<16x128xbf16, #tpu.memory_space<vmem>>, vector<2x64xbf16>
    tpu.vector_store %arg18[%c2_56, %c64_57], %105 {strides = array<i32>} : memref<16x128xbf16, #tpu.memory_space<vmem>>, vector<2x64xbf16>,
    %108 = vector.extract_strided_slice %7 {offsets = [14, 0], sizes = [2, 64], strides = [1, 1]} : vector<16x128xf32> to vector<2x64xf32>
    %cst_58 = arith.constant dense<0.000000e+00> : vector<2x64xf32>
    %109 = tpu.matmul %99, %8, %cst_58 {dimension_numbers = #tpu.dot_dimension_numbers<[1], [0], [0], [1], [0, 0, 1, 1], [], []>} : vector<2x64xbf16>, vector<64x64xbf16>, vector<2x64xf32> -> vector<2x64xf32>
    %110 = arith.addf %108, %109 : vector<2x64xf32>
    %cst_59 = arith.constant 0.000000e+00 : f32
    %111 = vector.broadcast %cst_59 : f32 to vector<2x64xf32>
    %112 = arith.maximumf %110, %111 : vector<2x64xf32>
    %113 = arith.truncf %112 : vector<2x64xf32> to vector<2x64xbf16>
    %114 = vector.extract_strided_slice %7 {offsets = [0, 64], sizes = [2, 64], strides = [1, 1]} : vector<16x128xf32> to vector<2x64xf32>
    %cst_60 = arith.constant dense<0.000000e+00> : vector<2x64xf32>
    %115 = tpu.matmul %105, %9, %cst_60 {dimension_numbers = #tpu.dot_dimension_numbers<[1], [0], [0], [1], [0, 0, 1, 1], [], []>} : vector<2x64xbf16>, vector<64x64xbf16>, vector<2x64xf32> -> vector<2x64xf32>
    %116 = arith.addf %114, %115 : vector<2x64xf32>
    %cst_61 = arith.constant 0.000000e+00 : f32
    %117 = vector.broadcast %cst_61 : f32 to vector<2x64xf32>
    %118 = arith.maximumf %116, %117 : vector<2x64xf32>
    %119 = arith.truncf %118 : vector<2x64xf32> to vector<2x64xbf16>
    %c14_62 = arith.constant 14 : index
    %c0_63 = arith.constant 0 : index
    %120 = vector.load %arg18[%c14_62, %c0_63] : memref<16x128xbf16, #tpu.memory_space<vmem>>, vector<2x64xbf16>
    tpu.vector_store %arg18[%c14_62, %c0_63], %113 {strides = array<i32>} : memref<16x128xbf16, #tpu.memory_space<vmem>>, vector<2x64xbf16>,
    %c0_64 = arith.constant 0 : index
    %c64_65 = arith.constant 64 : index
    %121 = vector.load %arg18[%c0_64, %c64_65] : memref<16x128xbf16, #tpu.memory_space<vmem>>, vector<2x64xbf16>
    tpu.vector_store %arg18[%c0_64, %c64_65], %119 {strides = array<i32>} : memref<16x128xbf16, #tpu.memory_space<vmem>>, vector<2x64xbf16>,
    %c0_66 = arith.constant 0 : index
    %c0_67 = arith.constant 0 : index
    %122 = vector.load %arg18[%c0_66, %c0_67] : memref<16x128xbf16, #tpu.memory_space<vmem>>, vector<16x128xbf16>
    %c0_68 = arith.constant 0 : index
    %c0_69 = arith.constant 0 : index
    %123 = vector.load %arg5[%c0_68, %c0_69] : memref<128x128xbf16, #tpu.memory_space<vmem>>, vector<128x128xbf16>
    %cst_70 = arith.constant dense<0.000000e+00> : vector<16x128xf32>
    %124 = tpu.matmul %122, %123, %cst_70 {dimension_numbers = #tpu.dot_dimension_numbers<[1], [0], [0], [1], [0, 0, 1, 1], [], []>} : vector<16x128xbf16>, vector<128x128xbf16>, vector<16x128xf32> -> vector<16x128xf32>
    %c0_71 = arith.constant 0 : index
    %c0_72 = arith.constant 0 : index
    %125 = vector.load %arg6[%c0_71, %c0_72] : memref<1x128xbf16, #tpu.memory_space<vmem>>, vector<1x128xbf16>
    %126 = arith.extf %125 : vector<1x128xbf16> to vector<1x128xf32>
    %127 = vector.broadcast %126 : vector<1x128xf32> to vector<16x128xf32>
    %128 = arith.addf %124, %127 : vector<16x128xf32>
    %c0_73 = arith.constant 0 : index
    %c0_74 = arith.constant 0 : index
    %129 = vector.load %arg7[%c0_73, %c0_74] : memref<64x64xbf16, #tpu.memory_space<vmem>>, vector<64x64xbf16>
    %c0_75 = arith.constant 0 : index
    %c0_76 = arith.constant 0 : index
    %130 = vector.load %arg8[%c0_75, %c0_76] : memref<64x64xbf16, #tpu.memory_space<vmem>>, vector<64x64xbf16>
    %131 = vector.extract_strided_slice %128 {offsets = [0, 0], sizes = [2, 64], strides = [1, 1]} : vector<16x128xf32> to vector<2x64xf32>
    %cst_77 = arith.constant dense<0.000000e+00> : vector<2x64xf32>
    %132 = tpu.matmul %0, %129, %cst_77 {dimension_numbers = #tpu.dot_dimension_numbers<[1], [0], [0], [1], [0, 0, 1, 1], [], []>} : vector<2x64xbf16>, vector<64x64xbf16>, vector<2x64xf32> -> vector<2x64xf32>
    %133 = arith.addf %131, %132 : vector<2x64xf32>
    %cst_78 = arith.constant 0.000000e+00 : f32
    %134 = vector.broadcast %cst_78 : f32 to vector<2x64xf32>
    %135 = arith.maximumf %133, %134 : vector<2x64xf32>
    %136 = arith.truncf %135 : vector<2x64xf32> to vector<2x64xbf16>
    %137 = vector.extract_strided_slice %128 {offsets = [14, 64], sizes = [2, 64], strides = [1, 1]} : vector<16x128xf32> to vector<2x64xf32>
    %cst_79 = arith.constant dense<0.000000e+00> : vector<2x64xf32>
    %138 = tpu.matmul %0, %130, %cst_79 {dimension_numbers = #tpu.dot_dimension_numbers<[1], [0], [0], [1], [0, 0, 1, 1], [], []>} : vector<2x64xbf16>, vector<64x64xbf16>, vector<2x64xf32> -> vector<2x64xf32>
    %139 = arith.addf %137, %138 : vector<2x64xf32>
    %cst_80 = arith.constant 0.000000e+00 : f32
    %140 = vector.broadcast %cst_80 : f32 to vector<2x64xf32>
    %141 = arith.maximumf %139, %140 : vector<2x64xf32>
    %142 = arith.truncf %141 : vector<2x64xf32> to vector<2x64xbf16>
    %143 = vector.extract_strided_slice %128 {offsets = [2, 0], sizes = [2, 64], strides = [1, 1]} : vector<16x128xf32> to vector<2x64xf32>
    %cst_81 = arith.constant dense<0.000000e+00> : vector<2x64xf32>
    %144 = tpu.matmul %136, %129, %cst_81 {dimension_numbers = #tpu.dot_dimension_numbers<[1], [0], [0], [1], [0, 0, 1, 1], [], []>} : vector<2x64xbf16>, vector<64x64xbf16>, vector<2x64xf32> -> vector<2x64xf32>
    %145 = arith.addf %143, %144 : vector<2x64xf32>
    %cst_82 = arith.constant 0.000000e+00 : f32
    %146 = vector.broadcast %cst_82 : f32 to vector<2x64xf32>
    %147 = arith.maximumf %145, %146 : vector<2x64xf32>
    %148 = arith.truncf %147 : vector<2x64xf32> to vector<2x64xbf16>
    %149 = vector.extract_strided_slice %128 {offsets = [12, 64], sizes = [2, 64], strides = [1, 1]} : vector<16x128xf32> to vector<2x64xf32>
    %cst_83 = arith.constant dense<0.000000e+00> : vector<2x64xf32>
    %150 = tpu.matmul %142, %130, %cst_83 {dimension_numbers = #tpu.dot_dimension_numbers<[1], [0], [0], [1], [0, 0, 1, 1], [], []>} : vector<2x64xbf16>, vector<64x64xbf16>, vector<2x64xf32> -> vector<2x64xf32>
    %151 = arith.addf %149, %150 : vector<2x64xf32>
    %cst_84 = arith.constant 0.000000e+00 : f32
    %152 = vector.broadcast %cst_84 : f32 to vector<2x64xf32>
    %153 = arith.maximumf %151, %152 : vector<2x64xf32>
    %154 = arith.truncf %153 : vector<2x64xf32> to vector<2x64xbf16>
    %155 = vector.extract_strided_slice %128 {offsets = [4, 0], sizes = [2, 64], strides = [1, 1]} : vector<16x128xf32> to vector<2x64xf32>
    %cst_85 = arith.constant dense<0.000000e+00> : vector<2x64xf32>
    %156 = tpu.matmul %148, %129, %cst_85 {dimension_numbers = #tpu.dot_dimension_numbers<[1], [0], [0], [1], [0, 0, 1, 1], [], []>} : vector<2x64xbf16>, vector<64x64xbf16>, vector<2x64xf32> -> vector<2x64xf32>
    %157 = arith.addf %155, %156 : vector<2x64xf32>
    %cst_86 = arith.constant 0.000000e+00 : f32
    %158 = vector.broadcast %cst_86 : f32 to vector<2x64xf32>
    %159 = arith.maximumf %157, %158 : vector<2x64xf32>
    %160 = arith.truncf %159 : vector<2x64xf32> to vector<2x64xbf16>
    %161 = vector.extract_strided_slice %128 {offsets = [10, 64], sizes = [2, 64], strides = [1, 1]} : vector<16x128xf32> to vector<2x64xf32>
    %cst_87 = arith.constant dense<0.000000e+00> : vector<2x64xf32>
    %162 = tpu.matmul %154, %130, %cst_87 {dimension_numbers = #tpu.dot_dimension_numbers<[1], [0], [0], [1], [0, 0, 1, 1], [], []>} : vector<2x64xbf16>, vector<64x64xbf16>, vector<2x64xf32> -> vector<2x64xf32>
    %163 = arith.addf %161, %162 : vector<2x64xf32>
    %cst_88 = arith.constant 0.000000e+00 : f32
    %164 = vector.broadcast %cst_88 : f32 to vector<2x64xf32>
    %165 = arith.maximumf %163, %164 : vector<2x64xf32>
    %166 = arith.truncf %165 : vector<2x64xf32> to vector<2x64xbf16>
    %167 = vector.extract_strided_slice %128 {offsets = [6, 0], sizes = [2, 64], strides = [1, 1]} : vector<16x128xf32> to vector<2x64xf32>
    %cst_89 = arith.constant dense<0.000000e+00> : vector<2x64xf32>
    %168 = tpu.matmul %160, %129, %cst_89 {dimension_numbers = #tpu.dot_dimension_numbers<[1], [0], [0], [1], [0, 0, 1, 1], [], []>} : vector<2x64xbf16>, vector<64x64xbf16>, vector<2x64xf32> -> vector<2x64xf32>
    %169 = arith.addf %167, %168 : vector<2x64xf32>
    %cst_90 = arith.constant 0.000000e+00 : f32
    %170 = vector.broadcast %cst_90 : f32 to vector<2x64xf32>
    %171 = arith.maximumf %169, %170 : vector<2x64xf32>
    %172 = arith.truncf %171 : vector<2x64xf32> to vector<2x64xbf16>
    %173 = vector.extract_strided_slice %128 {offsets = [8, 64], sizes = [2, 64], strides = [1, 1]} : vector<16x128xf32> to vector<2x64xf32>
    %cst_91 = arith.constant dense<0.000000e+00> : vector<2x64xf32>
    %174 = tpu.matmul %166, %130, %cst_91 {dimension_numbers = #tpu.dot_dimension_numbers<[1], [0], [0], [1], [0, 0, 1, 1], [], []>} : vector<2x64xbf16>, vector<64x64xbf16>, vector<2x64xf32> -> vector<2x64xf32>
    %175 = arith.addf %173, %174 : vector<2x64xf32>
    %cst_92 = arith.constant 0.000000e+00 : f32
    %176 = vector.broadcast %cst_92 : f32 to vector<2x64xf32>
    %177 = arith.maximumf %175, %176 : vector<2x64xf32>
    %178 = arith.truncf %177 : vector<2x64xf32> to vector<2x64xbf16>
    %179 = vector.extract_strided_slice %128 {offsets = [8, 0], sizes = [2, 64], strides = [1, 1]} : vector<16x128xf32> to vector<2x64xf32>
    %cst_93 = arith.constant dense<0.000000e+00> : vector<2x64xf32>
    %180 = tpu.matmul %172, %129, %cst_93 {dimension_numbers = #tpu.dot_dimension_numbers<[1], [0], [0], [1], [0, 0, 1, 1], [], []>} : vector<2x64xbf16>, vector<64x64xbf16>, vector<2x64xf32> -> vector<2x64xf32>
    %181 = arith.addf %179, %180 : vector<2x64xf32>
    %cst_94 = arith.constant 0.000000e+00 : f32
    %182 = vector.broadcast %cst_94 : f32 to vector<2x64xf32>
    %183 = arith.maximumf %181, %182 : vector<2x64xf32>
    %184 = arith.truncf %183 : vector<2x64xf32> to vector<2x64xbf16>
    %185 = vector.extract_strided_slice %128 {offsets = [6, 64], sizes = [2, 64], strides = [1, 1]} : vector<16x128xf32> to vector<2x64xf32>
    %cst_95 = arith.constant dense<0.000000e+00> : vector<2x64xf32>
    %186 = tpu.matmul %178, %130, %cst_95 {dimension_numbers = #tpu.dot_dimension_numbers<[1], [0], [0], [1], [0, 0, 1, 1], [], []>} : vector<2x64xbf16>, vector<64x64xbf16>, vector<2x64xf32> -> vector<2x64xf32>
    %187 = arith.addf %185, %186 : vector<2x64xf32>
    %cst_96 = arith.constant 0.000000e+00 : f32
    %188 = vector.broadcast %cst_96 : f32 to vector<2x64xf32>
    %189 = arith.maximumf %187, %188 : vector<2x64xf32>
    %190 = arith.truncf %189 : vector<2x64xf32> to vector<2x64xbf16>
    %191 = vector.extract_strided_slice %128 {offsets = [10, 0], sizes = [2, 64], strides = [1, 1]} : vector<16x128xf32> to vector<2x64xf32>
    %cst_97 = arith.constant dense<0.000000e+00> : vector<2x64xf32>
    %192 = tpu.matmul %184, %129, %cst_97 {dimension_numbers = #tpu.dot_dimension_numbers<[1], [0], [0], [1], [0, 0, 1, 1], [], []>} : vector<2x64xbf16>, vector<64x64xbf16>, vector<2x64xf32> -> vector<2x64xf32>
    %193 = arith.addf %191, %192 : vector<2x64xf32>
    %cst_98 = arith.constant 0.000000e+00 : f32
    %194 = vector.broadcast %cst_98 : f32 to vector<2x64xf32>
    %195 = arith.maximumf %193, %194 : vector<2x64xf32>
    %196 = arith.truncf %195 : vector<2x64xf32> to vector<2x64xbf16>
    %197 = vector.extract_strided_slice %128 {offsets = [4, 64], sizes = [2, 64], strides = [1, 1]} : vector<16x128xf32> to vector<2x64xf32>
    %cst_99 = arith.constant dense<0.000000e+00> : vector<2x64xf32>
    %198 = tpu.matmul %190, %130, %cst_99 {dimension_numbers = #tpu.dot_dimension_numbers<[1], [0], [0], [1], [0, 0, 1, 1], [], []>} : vector<2x64xbf16>, vector<64x64xbf16>, vector<2x64xf32> -> vector<2x64xf32>
    %199 = arith.addf %197, %198 : vector<2x64xf32>
    %cst_100 = arith.constant 0.000000e+00 : f32
    %200 = vector.broadcast %cst_100 : f32 to vector<2x64xf32>
    %201 = arith.maximumf %199, %200 : vector<2x64xf32>
    %202 = arith.truncf %201 : vector<2x64xf32> to vector<2x64xbf16>
    %203 = vector.extract_strided_slice %128 {offsets = [12, 0], sizes = [2, 64], strides = [1, 1]} : vector<16x128xf32> to vector<2x64xf32>
    %cst_101 = arith.constant dense<0.000000e+00> : vector<2x64xf32>
    %204 = tpu.matmul %196, %129, %cst_101 {dimension_numbers = #tpu.dot_dimension_numbers<[1], [0], [0], [1], [0, 0, 1, 1], [], []>} : vector<2x64xbf16>, vector<64x64xbf16>, vector<2x64xf32> -> vector<2x64xf32>
    %205 = arith.addf %203, %204 : vector<2x64xf32>
    %cst_102 = arith.constant 0.000000e+00 : f32
    %206 = vector.broadcast %cst_102 : f32 to vector<2x64xf32>
    %207 = arith.maximumf %205, %206 : vector<2x64xf32>
    %208 = arith.truncf %207 : vector<2x64xf32> to vector<2x64xbf16>
    %209 = vector.extract_strided_slice %128 {offsets = [2, 64], sizes = [2, 64], strides = [1, 1]} : vector<16x128xf32> to vector<2x64xf32>
    %cst_103 = arith.constant dense<0.000000e+00> : vector<2x64xf32>
    %210 = tpu.matmul %202, %130, %cst_103 {dimension_numbers = #tpu.dot_dimension_numbers<[1], [0], [0], [1], [0, 0, 1, 1], [], []>} : vector<2x64xbf16>, vector<64x64xbf16>, vector<2x64xf32> -> vector<2x64xf32>
    %211 = arith.addf %209, %210 : vector<2x64xf32>
    %cst_104 = arith.constant 0.000000e+00 : f32
    %212 = vector.broadcast %cst_104 : f32 to vector<2x64xf32>
    %213 = arith.maximumf %211, %212 : vector<2x64xf32>
    %214 = arith.truncf %213 : vector<2x64xf32> to vector<2x64xbf16>
    %215 = vector.extract_strided_slice %128 {offsets = [14, 0], sizes = [2, 64], strides = [1, 1]} : vector<16x128xf32> to vector<2x64xf32>
    %cst_105 = arith.constant dense<0.000000e+00> : vector<2x64xf32>
    %216 = tpu.matmul %208, %129, %cst_105 {dimension_numbers = #tpu.dot_dimension_numbers<[1], [0], [0], [1], [0, 0, 1, 1], [], []>} : vector<2x64xbf16>, vector<64x64xbf16>, vector<2x64xf32> -> vector<2x64xf32>
    %217 = arith.addf %215, %216 : vector<2x64xf32>
    %cst_106 = arith.constant 0.000000e+00 : f32
    %218 = vector.broadcast %cst_106 : f32 to vector<2x64xf32>
    %219 = arith.maximumf %217, %218 : vector<2x64xf32>
    %220 = arith.truncf %219 : vector<2x64xf32> to vector<2x64xbf16>
    %221 = vector.extract_strided_slice %128 {offsets = [0, 64], sizes = [2, 64], strides = [1, 1]} : vector<16x128xf32> to vector<2x64xf32>
    %cst_107 = arith.constant dense<0.000000e+00> : vector<2x64xf32>
    %222 = tpu.matmul %214, %130, %cst_107 {dimension_numbers = #tpu.dot_dimension_numbers<[1], [0], [0], [1], [0, 0, 1, 1], [], []>} : vector<2x64xbf16>, vector<64x64xbf16>, vector<2x64xf32> -> vector<2x64xf32>
    %223 = arith.addf %221, %222 : vector<2x64xf32>
    %cst_108 = arith.constant 0.000000e+00 : f32
    %224 = vector.broadcast %cst_108 : f32 to vector<2x64xf32>
    %225 = arith.maximumf %223, %224 : vector<2x64xf32>
    %226 = arith.truncf %225 : vector<2x64xf32> to vector<2x64xbf16>
    %227 = tpu.concatenate %220, %226 in 1 : vector<2x64xbf16>, vector<2x64xbf16> -> vector<2x128xbf16>
    %c0_109 = arith.constant 0 : index
    %c0_110 = arith.constant 0 : index
    %228 = vector.load %arg9[%c0_109, %c0_110] : memref<128x64xbf16, #tpu.memory_space<vmem>>, vector<128x64xbf16>
    %cst_111 = arith.constant dense<0.000000e+00> : vector<2x64xf32>
    %229 = tpu.matmul %227, %228, %cst_111 {dimension_numbers = #tpu.dot_dimension_numbers<[1], [0], [0], [1], [0, 0, 1, 1], [], []>} : vector<2x128xbf16>, vector<128x64xbf16>, vector<2x64xf32> -> vector<2x64xf32>
    %c0_112 = arith.constant 0 : index
    %c0_113 = arith.constant 0 : index
    %230 = vector.load %arg10[%c0_112, %c0_113] : memref<1x64xbf16, #tpu.memory_space<vmem>>, vector<1x64xbf16>
    %231 = arith.extf %230 : vector<1x64xbf16> to vector<1x64xf32>
    %232 = vector.broadcast %231 : vector<1x64xf32> to vector<2x64xf32>
    %233 = arith.addf %229, %232 : vector<2x64xf32>
    %cst_114 = arith.constant dense<0.000000e+00> : vector<2xf32>
    %234 = vector.multi_reduction <add>, %233, %cst_114 [1] : vector<2x64xf32> to vector<2xf32>
    %235 = vector.shape_cast %234 : vector<2xf32> to vector<2x1xf32>
    %cst_115 = arith.constant 6.400000e+01 : f32
    %236 = vector.broadcast %cst_115 : f32 to vector<2x1xf32>
    %237 = arith.divf %235, %236 : vector<2x1xf32>
    %238 = vector.broadcast %237 : vector<2x1xf32> to vector<2x64xf32>
    %239 = arith.subf %233, %238 : vector<2x64xf32>
    %240 = arith.mulf %239, %239 : vector<2x64xf32>
    %cst_116 = arith.constant dense<0.000000e+00> : vector<2xf32>
    %241 = vector.multi_reduction <add>, %240, %cst_116 [1] : vector<2x64xf32> to vector<2xf32>
    %242 = vector.shape_cast %241 : vector<2xf32> to vector<2x1xf32>
    %cst_117 = arith.constant 6.400000e+01 : f32
    %243 = vector.broadcast %cst_117 : f32 to vector<2x1xf32>
    %244 = arith.divf %242, %243 : vector<2x1xf32>
    %245 = vector.broadcast %237 : vector<2x1xf32> to vector<2x64xf32>
    %246 = arith.subf %233, %245 : vector<2x64xf32>
    %cst_118 = arith.constant 9.99999974E-6 : f32
    %247 = vector.broadcast %cst_118 : f32 to vector<2x1xf32>
    %248 = arith.addf %244, %247 : vector<2x1xf32>
    %249 = math.rsqrt %248 : vector<2x1xf32>
    %250 = vector.broadcast %249 : vector<2x1xf32> to vector<2x64xf32>
    %251 = arith.mulf %246, %250 : vector<2x64xf32>
    %c0_119 = arith.constant 0 : index
    %c0_120 = arith.constant 0 : index
    %252 = vector.load %arg11[%c0_119, %c0_120] : memref<1x64xbf16, #tpu.memory_space<vmem>>, vector<1x64xbf16>
    %253 = arith.extf %252 : vector<1x64xbf16> to vector<1x64xf32>
    %254 = vector.broadcast %253 : vector<1x64xf32> to vector<2x64xf32>
    %255 = arith.mulf %251, %254 : vector<2x64xf32>
    %c0_121 = arith.constant 0 : index
    %c0_122 = arith.constant 0 : index
    %256 = vector.load %arg12[%c0_121, %c0_122] : memref<1x64xbf16, #tpu.memory_space<vmem>>, vector<1x64xbf16>
    %257 = arith.extf %256 : vector<1x64xbf16> to vector<1x64xf32>
    %258 = vector.broadcast %257 : vector<1x64xf32> to vector<2x64xf32>
    %259 = arith.addf %255, %258 : vector<2x64xf32>
    %cst_123 = arith.constant 0.000000e+00 : f32
    %260 = vector.broadcast %cst_123 : f32 to vector<2x64xf32>
    %261 = arith.maximumf %259, %260 : vector<2x64xf32>
    %262 = arith.truncf %261 : vector<2x64xf32> to vector<2x64xbf16>
    %c0_124 = arith.constant 0 : index
    %c0_125 = arith.constant 0 : index
    %263 = vector.load %arg13[%c0_124, %c0_125] : memref<64x32xbf16, #tpu.memory_space<vmem>>, vector<64x32xbf16>
    %cst_126 = arith.constant dense<0.000000e+00> : vector<2x32xf32>
    %264 = tpu.matmul %262, %263, %cst_126 {dimension_numbers = #tpu.dot_dimension_numbers<[1], [0], [0], [1], [0, 0, 1, 1], [], []>} : vector<2x64xbf16>, vector<64x32xbf16>, vector<2x32xf32> -> vector<2x32xf32>
    %c0_127 = arith.constant 0 : index
    %c0_128 = arith.constant 0 : index
    %265 = vector.load %arg14[%c0_127, %c0_128] : memref<1x32xbf16, #tpu.memory_space<vmem>>, vector<1x32xbf16>
    %266 = arith.extf %265 : vector<1x32xbf16> to vector<1x32xf32>
    %267 = vector.broadcast %266 : vector<1x32xf32> to vector<2x32xf32>
    %268 = arith.addf %264, %267 : vector<2x32xf32>
    %cst_129 = arith.constant dense<0.000000e+00> : vector<2xf32>
    %269 = vector.multi_reduction <add>, %268, %cst_129 [1] : vector<2x32xf32> to vector<2xf32>
    %270 = vector.shape_cast %269 : vector<2xf32> to vector<2x1xf32>
    %cst_130 = arith.constant 3.200000e+01 : f32
    %271 = vector.broadcast %cst_130 : f32 to vector<2x1xf32>
    %272 = arith.divf %270, %271 : vector<2x1xf32>
    %273 = vector.broadcast %272 : vector<2x1xf32> to vector<2x32xf32>
    %274 = arith.subf %268, %273 : vector<2x32xf32>
    %275 = arith.mulf %274, %274 : vector<2x32xf32>
    %cst_131 = arith.constant dense<0.000000e+00> : vector<2xf32>
    %276 = vector.multi_reduction <add>, %275, %cst_131 [1] : vector<2x32xf32> to vector<2xf32>
    %277 = vector.shape_cast %276 : vector<2xf32> to vector<2x1xf32>
    %cst_132 = arith.constant 3.200000e+01 : f32
    %278 = vector.broadcast %cst_132 : f32 to vector<2x1xf32>
    %279 = arith.divf %277, %278 : vector<2x1xf32>
    %280 = vector.broadcast %272 : vector<2x1xf32> to vector<2x32xf32>
    %281 = arith.subf %268, %280 : vector<2x32xf32>
    %cst_133 = arith.constant 9.99999974E-6 : f32
    %282 = vector.broadcast %cst_133 : f32 to vector<2x1xf32>
    %283 = arith.addf %279, %282 : vector<2x1xf32>
    %284 = math.rsqrt %283 : vector<2x1xf32>
    %285 = vector.broadcast %284 : vector<2x1xf32> to vector<2x32xf32>
    %286 = arith.mulf %281, %285 : vector<2x32xf32>
    %c0_134 = arith.constant 0 : index
    %c0_135 = arith.constant 0 : index
    %287 = vector.load %arg15[%c0_134, %c0_135] : memref<1x32xbf16, #tpu.memory_space<vmem>>, vector<1x32xbf16>
    %288 = arith.extf %287 : vector<1x32xbf16> to vector<1x32xf32>
    %289 = vector.broadcast %288 : vector<1x32xf32> to vector<2x32xf32>
    %290 = arith.mulf %286, %289 : vector<2x32xf32>
    %c0_136 = arith.constant 0 : index
    %c0_137 = arith.constant 0 : index
    %291 = vector.load %arg16[%c0_136, %c0_137] : memref<1x32xbf16, #tpu.memory_space<vmem>>, vector<1x32xbf16>
    %292 = arith.extf %291 : vector<1x32xbf16> to vector<1x32xf32>
    %293 = vector.broadcast %292 : vector<1x32xf32> to vector<2x32xf32>
    %294 = arith.addf %290, %293 : vector<2x32xf32>
    %295 = arith.truncf %294 : vector<2x32xf32> to vector<2x32xbf16>
    %c0_138 = arith.constant 0 : index
    %c0_139 = arith.constant 0 : index
    %296 = vector.load %arg17[%c0_138, %c0_139] : memref<2x32xbf16, #tpu.memory_space<vmem>>, vector<2x32xbf16>
    tpu.vector_store %arg17[%c0_138, %c0_139], %295 {strides = array<i32>} : memref<2x32xbf16, #tpu.memory_space<vmem>>, vector<2x32xbf16>,
    return
  }
}

</mosaic_0001>

<llo_original>
// kernel: rnn_hypertoken_encoder.1
$region0: #{rnn_hypertoken_encoder.1}
  #allocation0 [shape = 'u32[]', space=smem, size = 0x4, offset = 0x4, fixed_abs, tag = 'smem constant byte address 0x4 - core index']
  #allocation1 [shape = 'u32[144,128]{1,0:T(1,128)}', space=vmem, size = 0x12000, scoped, tag = 'internal scratch']
  #allocation2 [shape = 'bf16[16,128]{1,0:T(16,128)(2,1)}', space=vmem, size = 0x1000, scoped, tag = 'scratch operand']
  %s0 = inlined_call_operand.vmem [shape: bf16[16,32], index: 0, kind: input, shape index: {}]
  %s1 = inlined_call_operand.vmem [shape: bf16[32,128], index: 1, kind: input, shape index: {}]
  %s2 = inlined_call_operand.vmem [shape: bf16[1,128], index: 2, kind: input, shape index: {}]
  %s3 = inlined_call_operand.vmem [shape: bf16[64,64], index: 3, kind: input, shape index: {}]
  %s4 = inlined_call_operand.vmem [shape: bf16[64,64], index: 4, kind: input, shape index: {}]
  %s5 = inlined_call_operand.vmem [shape: bf16[128,128], index: 5, kind: input, shape index: {}]
  %s6 = inlined_call_operand.vmem [shape: bf16[1,128], index: 6, kind: input, shape index: {}]
  %s7 = inlined_call_operand.vmem [shape: bf16[64,64], index: 7, kind: input, shape index: {}]
  %s8 = inlined_call_operand.vmem [shape: bf16[64,64], index: 8, kind: input, shape index: {}]
  %s9 = inlined_call_operand.vmem [shape: bf16[128,64], index: 9, kind: input, shape index: {}]
  %s10 = inlined_call_operand.vmem [shape: bf16[1,64], index: 10, kind: input, shape index: {}]
  %s11 = inlined_call_operand.vmem [shape: bf16[1,64], index: 11, kind: input, shape index: {}]
  %s12 = inlined_call_operand.vmem [shape: bf16[1,64], index: 12, kind: input, shape index: {}]
  %s13 = inlined_call_operand.vmem [shape: bf16[64,32], index: 13, kind: input, shape index: {}]
  %s14 = inlined_call_operand.vmem [shape: bf16[1,32], index: 14, kind: input, shape index: {}]
  %s15 = inlined_call_operand.vmem [shape: bf16[1,32], index: 15, kind: input, shape index: {}]
  %s16 = inlined_call_operand.vmem [shape: bf16[1,32], index: 16, kind: input, shape index: {}]
  %s17 = inlined_call_operand.hbm [shape: bf16[2,32], index: 17, kind: output, shape index: {}]
  %s18 = sld [smem:[#allocation0]]
  $region78: #{rnn_hypertoken_encoder.1} parent=0
    _
  %s20 = ssub.s32 1, %s18
  %s21 = scalar_select 0, %s20, %s18
  $region1: #{rnn_hypertoken_encoder.1} parent=0
    #allocation3 [shape = 'u8[512]{0}', space=vmem, size = 0x400, scoped, tag = 'output window, operand 0, single buffered']
    #allocation4 [shape = 's32[1]{0}', space=sflag, size = 0x4, scoped, tag = 'scoped memory for rnn_hypertoken_encoder.1']
    %22 = vsyncpa [#allocation4], 0
    // Predicated region
    $region2: #{rnn_hypertoken_encoder.1} parent=1 // pred_check
      _
    $region3: #{rnn_hypertoken_encoder.1} parent=1 // pred_check_branch
      %24 = sbr.rel (0) target = $region5
    $region4: #{rnn_hypertoken_encoder.1} parent=1 // pred_region
      _
    $region5: #{rnn_hypertoken_encoder.1} parent=1 // pred_fallthru
      _
    // Predicated region
    $region6: #{rnn_hypertoken_encoder.1} parent=1 // pred_check
      _
    $region7: #{rnn_hypertoken_encoder.1} parent=1 // pred_check_branch
      %26 = sbr.rel (0) target = $region9
    $region8: #{rnn_hypertoken_encoder.1} parent=1 // pred_region
      _
    $region9: #{rnn_hypertoken_encoder.1} parent=1 // pred_fallthru
      _
    // Predicated region
    $region10: #{rnn_hypertoken_encoder.1} parent=1 // pred_check
      _
    $region11: #{rnn_hypertoken_encoder.1} parent=1 // pred_check_branch
      %28 = sbr.rel (0) target = $region13
    $region12: #{rnn_hypertoken_encoder.1} parent=1 // pred_region
      _
    $region13: #{rnn_hypertoken_encoder.1} parent=1 // pred_fallthru
      _
    // Predicated region
    $region14: #{rnn_hypertoken_encoder.1} parent=1 // pred_check
      _
    $region15: #{rnn_hypertoken_encoder.1} parent=1 // pred_check_branch
      %30 = sbr.rel (0) target = $region17
    $region16: #{rnn_hypertoken_encoder.1} parent=1 // pred_region
      _
    $region17: #{rnn_hypertoken_encoder.1} parent=1 // pred_fallthru
      _
    // Predicated region
    $region18: #{rnn_hypertoken_encoder.1} parent=1 // pred_check
      _
    $region19: #{rnn_hypertoken_encoder.1} parent=1 // pred_check_branch
      %32 = sbr.rel (0) target = $region21
    $region20: #{rnn_hypertoken_encoder.1} parent=1 // pred_region
      _
    $region21: #{rnn_hypertoken_encoder.1} parent=1 // pred_fallthru
      _
    // Predicated region
    $region22: #{rnn_hypertoken_encoder.1} parent=1 // pred_check
      _
    $region23: #{rnn_hypertoken_encoder.1} parent=1 // pred_check_branch
      %34 = sbr.rel (0) target = $region25
    $region24: #{rnn_hypertoken_encoder.1} parent=1 // pred_region
      _
    $region25: #{rnn_hypertoken_encoder.1} parent=1 // pred_fallthru
      _
    // Predicated region
    $region26: #{rnn_hypertoken_encoder.1} parent=1 // pred_check
      _
    $region27: #{rnn_hypertoken_encoder.1} parent=1 // pred_check_branch
      %36 = sbr.rel (0) target = $region29
    $region28: #{rnn_hypertoken_encoder.1} parent=1 // pred_region
      _
    $region29: #{rnn_hypertoken_encoder.1} parent=1 // pred_fallthru
      _
    // Predicated region
    $region30: #{rnn_hypertoken_encoder.1} parent=1 // pred_check
      _
    $region31: #{rnn_hypertoken_encoder.1} parent=1 // pred_check_branch
      %38 = sbr.rel (0) target = $region33
    $region32: #{rnn_hypertoken_encoder.1} parent=1 // pred_region
      _
    $region33: #{rnn_hypertoken_encoder.1} parent=1 // pred_fallthru
      _
    // Predicated region
    $region34: #{rnn_hypertoken_encoder.1} parent=1 // pred_check
      _
    $region35: #{rnn_hypertoken_encoder.1} parent=1 // pred_check_branch
      %40 = sbr.rel (0) target = $region37
    $region36: #{rnn_hypertoken_encoder.1} parent=1 // pred_region
      _
    $region37: #{rnn_hypertoken_encoder.1} parent=1 // pred_fallthru
      _
    // Predicated region
    $region38: #{rnn_hypertoken_encoder.1} parent=1 // pred_check
      _
    $region39: #{rnn_hypertoken_encoder.1} parent=1 // pred_check_branch
      %42 = sbr.rel (0) target = $region41
    $region40: #{rnn_hypertoken_encoder.1} parent=1 // pred_region
      _
    $region41: #{rnn_hypertoken_encoder.1} parent=1 // pred_fallthru
      _
    // Predicated region
    $region42: #{rnn_hypertoken_encoder.1} parent=1 // pred_check
      _
    $region43: #{rnn_hypertoken_encoder.1} parent=1 // pred_check_branch
      %44 = sbr.rel (0) target = $region45
    $region44: #{rnn_hypertoken_encoder.1} parent=1 // pred_region
      _
    $region45: #{rnn_hypertoken_encoder.1} parent=1 // pred_fallthru
      _
    // Predicated region
    $region46: #{rnn_hypertoken_encoder.1} parent=1 // pred_check
      _
    $region47: #{rnn_hypertoken_encoder.1} parent=1 // pred_check_branch
      %46 = sbr.rel (0) target = $region49
    $region48: #{rnn_hypertoken_encoder.1} parent=1 // pred_region
      _
    $region49: #{rnn_hypertoken_encoder.1} parent=1 // pred_fallthru
      _
    // Predicated region
    $region50: #{rnn_hypertoken_encoder.1} parent=1 // pred_check
      _
    $region51: #{rnn_hypertoken_encoder.1} parent=1 // pred_check_branch
      %48 = sbr.rel (0) target = $region53
    $region52: #{rnn_hypertoken_encoder.1} parent=1 // pred_region
      _
    $region53: #{rnn_hypertoken_encoder.1} parent=1 // pred_fallthru
      _
    // Predicated region
    $region54: #{rnn_hypertoken_encoder.1} parent=1 // pred_check
      _
    $region55: #{rnn_hypertoken_encoder.1} parent=1 // pred_check_branch
      %50 = sbr.rel (0) target = $region57
    $region56: #{rnn_hypertoken_encoder.1} parent=1 // pred_region
      _
    $region57: #{rnn_hypertoken_encoder.1} parent=1 // pred_fallthru
      _
    // Predicated region
    $region58: #{rnn_hypertoken_encoder.1} parent=1 // pred_check
      _
    $region59: #{rnn_hypertoken_encoder.1} parent=1 // pred_check_branch
      %52 = sbr.rel (0) target = $region61
    $region60: #{rnn_hypertoken_encoder.1} parent=1 // pred_region
      _
    $region61: #{rnn_hypertoken_encoder.1} parent=1 // pred_fallthru
      _
    // Predicated region
    $region62: #{rnn_hypertoken_encoder.1} parent=1 // pred_check
      _
    $region63: #{rnn_hypertoken_encoder.1} parent=1 // pred_check_branch
      %54 = sbr.rel (0) target = $region65
    $region64: #{rnn_hypertoken_encoder.1} parent=1 // pred_region
      _
    $region65: #{rnn_hypertoken_encoder.1} parent=1 // pred_fallthru
      _
    // Predicated region
    $region66: #{rnn_hypertoken_encoder.1} parent=1 // pred_check
      _
    $region67: #{rnn_hypertoken_encoder.1} parent=1 // pred_check_branch
      %56 = sbr.rel (0) target = $region69
    $region68: #{rnn_hypertoken_encoder.1} parent=1 // pred_region
      _
    $region69: #{rnn_hypertoken_encoder.1} parent=1 // pred_fallthru
      _
    %v58 = vld [vmem:[%s0] sm:$0xf]
    %v59 = vld [vmem:[%s0 + $0x4] sm:$0xf]
    %v60 = vld [vmem:[%s1] sm:$0xf]
    %v61 = vld [vmem:[%s1 + $0x4] sm:$0xf]
    %v62 = vld [vmem:[%s1 + $0x8] sm:$0xf]
    %v63 = vld [vmem:[%s1 + $0xc] sm:$0xf]
    %v64 = vld [vmem:[%s2] sm:$0x1]
    %v65 = vunpack.c.l.bf16 %v64
    %v66 = vlaneseq
    %v67 = vshrl.u32 %v66, 7
    %v68 = vsub.s32 0, %v67
    %v69 = vrot.slane %v65, %v68
    %v72 = vunpack.c.l.b16 %v58
    %v73 = vunpack.c.l.b16 %v59
    %v74 = vpack.c.b16 %v73, %v72
    %v79 = vunpack.c.l.b16 %v60
    %v80 = vunpack.c.l.b16 %v61
    %v81 = vunpack.c.l.b16 %v62
    %v82 = vunpack.c.l.b16 %v63
    %v83 = vpack.c.b16 %v80, %v79
    %v84 = vpack.c.b16 %v82, %v81
    %vm87 = vcmask 261120
    %v89 = vsel %vm87, %v74, 0
    %91 = vmatprep.subr.bf16.mxu0 0
    %92 = vmatpush1.bf16.msra.mxu0 %v83
    %93 = vmatprep.subr.bf16.mxu0 0
    %94 = vmatpush1.bf16.msra.mxu0 %v84
    %95 = vmatprep.subr.bf16.mxu0 0
    %96 = vmatpush1.bf16.msra.mxu0 0
    %97 = vmatprep.subr.bf16.mxu0 0
    %98 = vmatpush1.bf16.msra.mxu0 0
    %99 = vmatprep.subr.bf16.mxu0 0
    %100 = vmatpush1.bf16.msra.mxu0 0
    %101 = vmatprep.subr.bf16.mxu0 0
    %102 = vmatpush1.bf16.msra.mxu0 0
    %103 = vmatprep.subr.bf16.mxu0 0
    %104 = vmatpush1.bf16.msra.mxu0 0
    %105 = vmatprep.subr.bf16.mxu0 0
    %106 = vmatpush1.bf16.msra.mxu0 0
    %107 = vmatprep.subr.bf16.mxu0 0
    %108 = vmatpush1.bf16.msra.mxu0 0
    %109 = vmatprep.subr.bf16.mxu0 0
    %110 = vmatpush1.bf16.msra.mxu0 0
    %111 = vmatprep.subr.bf16.mxu0 0
    %112 = vmatpush1.bf16.msra.mxu0 0
    %113 = vmatprep.subr.bf16.mxu0 0
    %114 = vmatpush1.bf16.msra.mxu0 0
    %115 = vmatprep.subr.bf16.mxu0 0
    %116 = vmatpush1.bf16.msra.mxu0 0
    %117 = vmatprep.subr.bf16.mxu0 0
    %118 = vmatpush1.bf16.msra.mxu0 0
    %119 = vmatprep.subr.bf16.mxu0 0
    %120 = vmatpush1.bf16.msra.mxu0 0
    %121 = vmatprep.subr.bf16.mxu0 0
    %122 = vmatpush1.bf16.msra.mxu0 0
    %123 = vmatprep.mubr.bf16.mxu0 0
    %124 = vmatmul.mubr.bf16.gmra.mrb[0].mxu0 %v89
    %v125 = vpop.f32.mrb[0].mxu0
    %v126 = vadd.f32 %v69, %v125
    %v127 = vpop.f32.mrb[0].mxu0
    %v128 = vpop.f32.mrb[0].mxu0
    %v129 = vadd.f32 %v69, %v128
    %v130 = vpop.f32.mrb[0].mxu0
    %131 = vdwg.mxu0
    %v132 = vld [vmem:[%s3] sm:$0xf]
    %v133 = vld [vmem:[%s3 + $0x4] sm:$0xf]
    %v134 = vld [vmem:[%s3 + $0x8] sm:$0xf]
    %v135 = vld [vmem:[%s3 + $0xc] sm:$0xf]
    %v136 = vld [vmem:[%s3 + $0x10] sm:$0xf]
    %v137 = vld [vmem:[%s3 + $0x14] sm:$0xf]
    %v138 = vld [vmem:[%s3 + $0x18] sm:$0xf]
    %v139 = vld [vmem:[%s3 + $0x1c] sm:$0xf]
    %v140 = vld [vmem:[%s4] sm:$0xf]
    %v141 = vld [vmem:[%s4 + $0x4] sm:$0xf]
    %v142 = vld [vmem:[%s4 + $0x8] sm:$0xf]
    %v143 = vld [vmem:[%s4 + $0xc] sm:$0xf]
    %v144 = vld [vmem:[%s4 + $0x10] sm:$0xf]
    %v145 = vld [vmem:[%s4 + $0x14] sm:$0xf]
    %v146 = vld [vmem:[%s4 + $0x18] sm:$0xf]
    %v147 = vld [vmem:[%s4 + $0x1c] sm:$0xf]
    %v156 = vunpack.c.l.b16 %v132
    %v157 = vunpack.c.l.b16 %v133
    %v158 = vunpack.c.l.b16 %v134
    %v159 = vunpack.c.l.b16 %v135
    %v160 = vunpack.c.l.b16 %v136
    %v161 = vunpack.c.l.b16 %v137
    %v162 = vunpack.c.l.b16 %v138
    %v163 = vunpack.c.l.b16 %v139
    %v164 = vpack.c.b16 %v157, %v156
    %v165 = vpack.c.b16 %v159, %v158
    %v166 = vpack.c.b16 %v161, %v160
    %v167 = vpack.c.b16 %v163, %v162
    %vm172 = vcmask 523264
    %v174 = vsel %vm172, 0, 0
    %176 = vmatprep.subr.bf16.mxu0 0
    %177 = vmatpush1.bf16.msra.mxu0 %v164
    %178 = vmatprep.subr.bf16.mxu0 0
    %179 = vmatpush1.bf16.msra.mxu0 %v165
    %180 = vmatprep.subr.bf16.mxu0 0
    %181 = vmatpush1.bf16.msra.mxu0 %v166
    %182 = vmatprep.subr.bf16.mxu0 0
    %183 = vmatpush1.bf16.msra.mxu0 %v167
    %184 = vmatprep.subr.bf16.mxu0 0
    %185 = vmatpush1.bf16.msra.mxu0 0
    %186 = vmatprep.subr.bf16.mxu0 0
    %187 = vmatpush1.bf16.msra.mxu0 0
    %188 = vmatprep.subr.bf16.mxu0 0
    %189 = vmatpush1.bf16.msra.mxu0 0
    %190 = vmatprep.subr.bf16.mxu0 0
    %191 = vmatpush1.bf16.msra.mxu0 0
    %192 = vmatprep.subr.bf16.mxu0 0
    %193 = vmatpush1.bf16.msra.mxu0 0
    %194 = vmatprep.subr.bf16.mxu0 0
    %195 = vmatpush1.bf16.msra.mxu0 0
    %196 = vmatprep.subr.bf16.mxu0 0
    %197 = vmatpush1.bf16.msra.mxu0 0
    %198 = vmatprep.subr.bf16.mxu0 0
    %199 = vmatpush1.bf16.msra.mxu0 0
    %200 = vmatprep.subr.bf16.mxu0 0
    %201 = vmatpush1.bf16.msra.mxu0 0
    %202 = vmatprep.subr.bf16.mxu0 0
    %203 = vmatpush1.bf16.msra.mxu0 0
    %204 = vmatprep.subr.bf16.mxu0 0
    %205 = vmatpush1.bf16.msra.mxu0 0
    %206 = vmatprep.subr.bf16.mxu0 0
    %207 = vmatpush1.bf16.msra.mxu0 0
    %208 = vmatprep.mubr.bf16.mxu0 0
    %209 = vmatmul.mubr.bf16.gmra.mrb[0].mxu0 %v174
    %v210 = vpop.f32.mrb[0].mxu0
    %v211 = vadd.f32 0.0, %v210
    %v212 = vpop.f32.mrb[0].mxu0
    %v213 = vpop.f32.mrb[0].mxu0
    %v214 = vpop.f32.mrb[0].mxu0
    %215 = vdwg.mxu0
    %v216 = vadd.f32 %v126, %v211
    %v217 = vmax.f32 %v216, 0.0
    %v218 = vpack.c.bf16 %v217, %v217
    %v227 = vunpack.c.l.b16 %v140
    %v228 = vunpack.c.l.b16 %v141
    %v229 = vunpack.c.l.b16 %v142
    %v230 = vunpack.c.l.b16 %v143
    %v231 = vunpack.c.l.b16 %v144
    %v232 = vunpack.c.l.b16 %v145
    %v233 = vunpack.c.l.b16 %v146
    %v234 = vunpack.c.l.b16 %v147
    %v235 = vpack.c.b16 %v228, %v227
    %v236 = vpack.c.b16 %v230, %v229
    %v237 = vpack.c.b16 %v232, %v231
    %v238 = vpack.c.b16 %v234, %v233
    %243 = vmatprep.subr.bf16.mxu0 0
    %244 = vmatpush1.bf16.msra.mxu0 %v235
    %245 = vmatprep.subr.bf16.mxu0 0
    %246 = vmatpush1.bf16.msra.mxu0 %v236
    %247 = vmatprep.subr.bf16.mxu0 0
    %248 = vmatpush1.bf16.msra.mxu0 %v237
    %249 = vmatprep.subr.bf16.mxu0 0
    %250 = vmatpush1.bf16.msra.mxu0 %v238
    %251 = vmatprep.subr.bf16.mxu0 0
    %252 = vmatpush1.bf16.msra.mxu0 0
    %253 = vmatprep.subr.bf16.mxu0 0
    %254 = vmatpush1.bf16.msra.mxu0 0
    %255 = vmatprep.subr.bf16.mxu0 0
    %256 = vmatpush1.bf16.msra.mxu0 0
    %257 = vmatprep.subr.bf16.mxu0 0
    %258 = vmatpush1.bf16.msra.mxu0 0
    %259 = vmatprep.subr.bf16.mxu0 0
    %260 = vmatpush1.bf16.msra.mxu0 0
    %261 = vmatprep.subr.bf16.mxu0 0
    %262 = vmatpush1.bf16.msra.mxu0 0
    %263 = vmatprep.subr.bf16.mxu0 0
    %264 = vmatpush1.bf16.msra.mxu0 0
    %265 = vmatprep.subr.bf16.mxu0 0
    %266 = vmatpush1.bf16.msra.mxu0 0
    %267 = vmatprep.subr.bf16.mxu0 0
    %268 = vmatpush1.bf16.msra.mxu0 0
    %269 = vmatprep.subr.bf16.mxu0 0
    %270 = vmatpush1.bf16.msra.mxu0 0
    %271 = vmatprep.subr.bf16.mxu0 0
    %272 = vmatpush1.bf16.msra.mxu0 0
    %273 = vmatprep.subr.bf16.mxu0 0
    %274 = vmatpush1.bf16.msra.mxu0 0
    %275 = vmatprep.mubr.bf16.mxu0 0
    %276 = vmatmul.mubr.bf16.gmra.mrb[0].mxu0 %v174
    %v277 = vpop.f32.mrb[0].mxu0
    %v278 = vadd.f32 0.0, %v277
    %v279 = vpop.f32.mrb[0].mxu0
    %v280 = vpop.f32.mrb[0].mxu0
    %v281 = vpop.f32.mrb[0].mxu0
    %282 = vdwg.mxu0
    %v284 = vrot.slane %v278, 2
    %285 = vrot.lane.b32.xlu0 %v284, 64
    %v286 = vpop.permute.xlu0 %285
    %v288 = vadd.f32 %v129, %v286
    %v289 = vmax.f32 %v288, 0.0
    %v290 = vpack.c.bf16 %v289, %v289
    %vm291 = vcmask 516096
    %292 = vst.msk [vmem:[#allocation2] sm:$0x1] %vm291, %v218
    %v294 = vrot.slane %v290, 4
    %vm296 = vcmask 1048071
    %297 = vst.msk [vmem:[#allocation2] sm:$0x80] %vm296, %v294
    %v299 = vsel %vm172, %v218, 0
    %301 = vmatprep.subr.bf16.mxu0 0
    %302 = vmatpush1.bf16.msra.mxu0 %v164
    %303 = vmatprep.subr.bf16.mxu0 0
    %304 = vmatpush1.bf16.msra.mxu0 %v165
    %305 = vmatprep.subr.bf16.mxu0 0
    %306 = vmatpush1.bf16.msra.mxu0 %v166
    %307 = vmatprep.subr.bf16.mxu0 0
    %308 = vmatpush1.bf16.msra.mxu0 %v167
    %309 = vmatprep.subr.bf16.mxu0 0
    %310 = vmatpush1.bf16.msra.mxu0 0
    %311 = vmatprep.subr.bf16.mxu0 0
    %312 = vmatpush1.bf16.msra.mxu0 0
    %313 = vmatprep.subr.bf16.mxu0 0
    %314 = vmatpush1.bf16.msra.mxu0 0
    %315 = vmatprep.subr.bf16.mxu0 0
    %316 = vmatpush1.bf16.msra.mxu0 0
    %317 = vmatprep.subr.bf16.mxu0 0
    %318 = vmatpush1.bf16.msra.mxu0 0
    %319 = vmatprep.subr.bf16.mxu0 0
    %320 = vmatpush1.bf16.msra.mxu0 0
    %321 = vmatprep.subr.bf16.mxu0 0
    %322 = vmatpush1.bf16.msra.mxu0 0
    %323 = vmatprep.subr.bf16.mxu0 0
    %324 = vmatpush1.bf16.msra.mxu0 0
    %325 = vmatprep.subr.bf16.mxu0 0
    %326 = vmatpush1.bf16.msra.mxu0 0
    %327 = vmatprep.subr.bf16.mxu0 0
    %328 = vmatpush1.bf16.msra.mxu0 0
    %329 = vmatprep.subr.bf16.mxu0 0
    %330 = vmatpush1.bf16.msra.mxu0 0
    %331 = vmatprep.subr.bf16.mxu0 0
    %332 = vmatpush1.bf16.msra.mxu0 0
    %333 = vmatprep.mubr.bf16.mxu0 0
    %334 = vmatmul.mubr.bf16.gmra.mrb[0].mxu0 %v299
    %v335 = vpop.f32.mrb[0].mxu0
    %v336 = vadd.f32 0.0, %v335
    %v337 = vpop.f32.mrb[0].mxu0
    %v338 = vpop.f32.mrb[0].mxu0
    %v339 = vpop.f32.mrb[0].mxu0
    %340 = vdwg.mxu0
    %v342 = vrot.slane %v336, 6
    %v344 = vadd.f32 %v126, %v342
    %v345 = vmax.f32 %v344, 0.0
    %v346 = vpack.c.bf16 %v345, %v345
    %v347 = vrot.slane %v290, 3
    %348 = vrot.lane.b32.xlu0 %v347, 64
    %v349 = vpop.permute.xlu0 %348
    %v351 = vsel %vm172, %v349, 0
    %353 = vmatprep.subr.bf16.mxu0 0
    %354 = vmatpush1.bf16.msra.mxu0 %v235
    %355 = vmatprep.subr.bf16.mxu0 0
    %356 = vmatpush1.bf16.msra.mxu0 %v236
    %357 = vmatprep.subr.bf16.mxu0 0
    %358 = vmatpush1.bf16.msra.mxu0 %v237
    %359 = vmatprep.subr.bf16.mxu0 0
    %360 = vmatpush1.bf16.msra.mxu0 %v238
    %361 = vmatprep.subr.bf16.mxu0 0
    %362 = vmatpush1.bf16.msra.mxu0 0
    %363 = vmatprep.subr.bf16.mxu0 0
    %364 = vmatpush1.bf16.msra.mxu0 0
    %365 = vmatprep.subr.bf16.mxu0 0
    %366 = vmatpush1.bf16.msra.mxu0 0
    %367 = vmatprep.subr.bf16.mxu0 0
    %368 = vmatpush1.bf16.msra.mxu0 0
    %369 = vmatprep.subr.bf16.mxu0 0
    %370 = vmatpush1.bf16.msra.mxu0 0
    %371 = vmatprep.subr.bf16.mxu0 0
    %372 = vmatpush1.bf16.msra.mxu0 0
    %373 = vmatprep.subr.bf16.mxu0 0
    %374 = vmatpush1.bf16.msra.mxu0 0
    %375 = vmatprep.subr.bf16.mxu0 0
    %376 = vmatpush1.bf16.msra.mxu0 0
    %377 = vmatprep.subr.bf16.mxu0 0
    %378 = vmatpush1.bf16.msra.mxu0 0
    %379 = vmatprep.subr.bf16.mxu0 0
    %380 = vmatpush1.bf16.msra.mxu0 0
    %381 = vmatprep.subr.bf16.mxu0 0
    %382 = vmatpush1.bf16.msra.mxu0 0
    %383 = vmatprep.subr.bf16.mxu0 0
    %384 = vmatpush1.bf16.msra.mxu0 0
    %385 = vmatprep.mubr.bf16.mxu0 0
    %386 = vmatmul.mubr.bf16.gmra.mrb[0].mxu0 %v351
    %v387 = vpop.f32.mrb[0].mxu0
    %v388 = vadd.f32 0.0, %v387
    %v389 = vpop.f32.mrb[0].mxu0
    %v390 = vpop.f32.mrb[0].mxu0
    %v391 = vpop.f32.mrb[0].mxu0
    %392 = vdwg.mxu0
    %v394 = vrot.slane %v388, 4
    %395 = vrot.lane.b32.xlu0 %v394, 64
    %v396 = vpop.permute.xlu0 %395
    %v398 = vadd.f32 %v129, %v396
    %v399 = vmax.f32 %v398, 0.0
    %v400 = vpack.c.bf16 %v399, %v399
    %vm401 = vcmask 517121
    %402 = vst.msk [vmem:[#allocation2] sm:$0x2] %vm401, %v346
    %v404 = vrot.slane %v400, 4
    %vm406 = vcmask 1047046
    %407 = vst.msk [vmem:[#allocation2] sm:$0x40] %vm406, %v404
    %v409 = vrot.slane %v346, 1
    %v411 = vsel %vm172, %v409, 0
    %413 = vmatprep.subr.bf16.mxu0 0
    %414 = vmatpush1.bf16.msra.mxu0 %v164
    %415 = vmatprep.subr.bf16.mxu0 0
    %416 = vmatpush1.bf16.msra.mxu0 %v165
    %417 = vmatprep.subr.bf16.mxu0 0
    %418 = vmatpush1.bf16.msra.mxu0 %v166
    %419 = vmatprep.subr.bf16.mxu0 0
    %420 = vmatpush1.bf16.msra.mxu0 %v167
    %421 = vmatprep.subr.bf16.mxu0 0
    %422 = vmatpush1.bf16.msra.mxu0 0
    %423 = vmatprep.subr.bf16.mxu0 0
    %424 = vmatpush1.bf16.msra.mxu0 0
    %425 = vmatprep.subr.bf16.mxu0 0
    %426 = vmatpush1.bf16.msra.mxu0 0
    %427 = vmatprep.subr.bf16.mxu0 0
    %428 = vmatpush1.bf16.msra.mxu0 0
    %429 = vmatprep.subr.bf16.mxu0 0
    %430 = vmatpush1.bf16.msra.mxu0 0
    %431 = vmatprep.subr.bf16.mxu0 0
    %432 = vmatpush1.bf16.msra.mxu0 0
    %433 = vmatprep.subr.bf16.mxu0 0
    %434 = vmatpush1.bf16.msra.mxu0 0
    %435 = vmatprep.subr.bf16.mxu0 0
    %436 = vmatpush1.bf16.msra.mxu0 0
    %437 = vmatprep.subr.bf16.mxu0 0
    %438 = vmatpush1.bf16.msra.mxu0 0
    %439 = vmatprep.subr.bf16.mxu0 0
    %440 = vmatpush1.bf16.msra.mxu0 0
    %441 = vmatprep.subr.bf16.mxu0 0
    %442 = vmatpush1.bf16.msra.mxu0 0
    %443 = vmatprep.subr.bf16.mxu0 0
    %444 = vmatpush1.bf16.msra.mxu0 0
    %445 = vmatprep.mubr.bf16.mxu0 0
    %446 = vmatmul.mubr.bf16.gmra.mrb[0].mxu0 %v411
    %v447 = vpop.f32.mrb[0].mxu0
    %v448 = vadd.f32 0.0, %v447
    %v449 = vpop.f32.mrb[0].mxu0
    %v450 = vpop.f32.mrb[0].mxu0
    %v451 = vpop.f32.mrb[0].mxu0
    %452 = vdwg.mxu0
    %v454 = vrot.slane %v448, 4
    %v456 = vadd.f32 %v126, %v454
    %v457 = vmax.f32 %v456, 0.0
    %v458 = vpack.c.bf16 %v457, %v457
    %v459 = vrot.slane %v400, 2
    %460 = vrot.lane.b32.xlu0 %v459, 64
    %v461 = vpop.permute.xlu0 %460
    %v463 = vsel %vm172, %v461, 0
    %465 = vmatprep.subr.bf16.mxu0 0
    %466 = vmatpush1.bf16.msra.mxu0 %v235
    %467 = vmatprep.subr.bf16.mxu0 0
    %468 = vmatpush1.bf16.msra.mxu0 %v236
    %469 = vmatprep.subr.bf16.mxu0 0
    %470 = vmatpush1.bf16.msra.mxu0 %v237
    %471 = vmatprep.subr.bf16.mxu0 0
    %472 = vmatpush1.bf16.msra.mxu0 %v238
    %473 = vmatprep.subr.bf16.mxu0 0
    %474 = vmatpush1.bf16.msra.mxu0 0
    %475 = vmatprep.subr.bf16.mxu0 0
    %476 = vmatpush1.bf16.msra.mxu0 0
    %477 = vmatprep.subr.bf16.mxu0 0
    %478 = vmatpush1.bf16.msra.mxu0 0
    %479 = vmatprep.subr.bf16.mxu0 0
    %480 = vmatpush1.bf16.msra.mxu0 0
    %481 = vmatprep.subr.bf16.mxu0 0
    %482 = vmatpush1.bf16.msra.mxu0 0
    %483 = vmatprep.subr.bf16.mxu0 0
    %484 = vmatpush1.bf16.msra.mxu0 0
    %485 = vmatprep.subr.bf16.mxu0 0
    %486 = vmatpush1.bf16.msra.mxu0 0
    %487 = vmatprep.subr.bf16.mxu0 0
    %488 = vmatpush1.bf16.msra.mxu0 0
    %489 = vmatprep.subr.bf16.mxu0 0
    %490 = vmatpush1.bf16.msra.mxu0 0
    %491 = vmatprep.subr.bf16.mxu0 0
    %492 = vmatpush1.bf16.msra.mxu0 0
    %493 = vmatprep.subr.bf16.mxu0 0
    %494 = vmatpush1.bf16.msra.mxu0 0
    %495 = vmatprep.subr.bf16.mxu0 0
    %496 = vmatpush1.bf16.msra.mxu0 0
    %497 = vmatprep.mubr.bf16.mxu0 0
    %498 = vmatmul.mubr.bf16.gmra.mrb[0].mxu0 %v463
    %v499 = vpop.f32.mrb[0].mxu0
    %v500 = vadd.f32 0.0, %v499
    %v501 = vpop.f32.mrb[0].mxu0
    %v502 = vpop.f32.mrb[0].mxu0
    %v503 = vpop.f32.mrb[0].mxu0
    %504 = vdwg.mxu0
    %v506 = vrot.slane %v500, 6
    %507 = vrot.lane.b32.xlu0 %v506, 64
    %v508 = vpop.permute.xlu0 %507
    %v510 = vadd.f32 %v129, %v508
    %v511 = vmax.f32 %v510, 0.0
    %v512 = vpack.c.bf16 %v511, %v511
    %vm513 = vcmask 518146
    %514 = vst.msk [vmem:[#allocation2] sm:$0x4] %vm513, %v458
    %v516 = vrot.slane %v512, 4
    %vm518 = vcmask 1046021
    %519 = vst.msk [vmem:[#allocation2] sm:$0x20] %vm518, %v516
    %v521 = vrot.slane %v458, 2
    %v523 = vsel %vm172, %v521, 0
    %525 = vmatprep.subr.bf16.mxu0 0
    %526 = vmatpush1.bf16.msra.mxu0 %v164
    %527 = vmatprep.subr.bf16.mxu0 0
    %528 = vmatpush1.bf16.msra.mxu0 %v165
    %529 = vmatprep.subr.bf16.mxu0 0
    %530 = vmatpush1.bf16.msra.mxu0 %v166
    %531 = vmatprep.subr.bf16.mxu0 0
    %532 = vmatpush1.bf16.msra.mxu0 %v167
    %533 = vmatprep.subr.bf16.mxu0 0
    %534 = vmatpush1.bf16.msra.mxu0 0
    %535 = vmatprep.subr.bf16.mxu0 0
    %536 = vmatpush1.bf16.msra.mxu0 0
    %537 = vmatprep.subr.bf16.mxu0 0
    %538 = vmatpush1.bf16.msra.mxu0 0
    %539 = vmatprep.subr.bf16.mxu0 0
    %540 = vmatpush1.bf16.msra.mxu0 0
    %541 = vmatprep.subr.bf16.mxu0 0
    %542 = vmatpush1.bf16.msra.mxu0 0
    %543 = vmatprep.subr.bf16.mxu0 0
    %544 = vmatpush1.bf16.msra.mxu0 0
    %545 = vmatprep.subr.bf16.mxu0 0
    %546 = vmatpush1.bf16.msra.mxu0 0
    %547 = vmatprep.subr.bf16.mxu0 0
    %548 = vmatpush1.bf16.msra.mxu0 0
    %549 = vmatprep.subr.bf16.mxu0 0
    %550 = vmatpush1.bf16.msra.mxu0 0
    %551 = vmatprep.subr.bf16.mxu0 0
    %552 = vmatpush1.bf16.msra.mxu0 0
    %553 = vmatprep.subr.bf16.mxu0 0
    %554 = vmatpush1.bf16.msra.mxu0 0
    %555 = vmatprep.subr.bf16.mxu0 0
    %556 = vmatpush1.bf16.msra.mxu0 0
    %557 = vmatprep.mubr.bf16.mxu0 0
    %558 = vmatmul.mubr.bf16.gmra.mrb[0].mxu0 %v523
    %v559 = vpop.f32.mrb[0].mxu0
    %v560 = vadd.f32 0.0, %v559
    %v561 = vpop.f32.mrb[0].mxu0
    %v562 = vpop.f32.mrb[0].mxu0
    %v563 = vpop.f32.mrb[0].mxu0
    %564 = vdwg.mxu0
    %v566 = vrot.slane %v560, 2
    %v568 = vadd.f32 %v126, %v566
    %v569 = vmax.f32 %v568, 0.0
    %v570 = vpack.c.bf16 %v569, %v569
    %v571 = vrot.slane %v512, 1
    %572 = vrot.lane.b32.xlu0 %v571, 64
    %v573 = vpop.permute.xlu0 %572
    %v575 = vsel %vm172, %v573, 0
    %577 = vmatprep.subr.bf16.mxu0 0
    %578 = vmatpush1.bf16.msra.mxu0 %v235
    %579 = vmatprep.subr.bf16.mxu0 0
    %580 = vmatpush1.bf16.msra.mxu0 %v236
    %581 = vmatprep.subr.bf16.mxu0 0
    %582 = vmatpush1.bf16.msra.mxu0 %v237
    %583 = vmatprep.subr.bf16.mxu0 0
    %584 = vmatpush1.bf16.msra.mxu0 %v238
    %585 = vmatprep.subr.bf16.mxu0 0
    %586 = vmatpush1.bf16.msra.mxu0 0
    %587 = vmatprep.subr.bf16.mxu0 0
    %588 = vmatpush1.bf16.msra.mxu0 0
    %589 = vmatprep.subr.bf16.mxu0 0
    %590 = vmatpush1.bf16.msra.mxu0 0
    %591 = vmatprep.subr.bf16.mxu0 0
    %592 = vmatpush1.bf16.msra.mxu0 0
    %593 = vmatprep.subr.bf16.mxu0 0
    %594 = vmatpush1.bf16.msra.mxu0 0
    %595 = vmatprep.subr.bf16.mxu0 0
    %596 = vmatpush1.bf16.msra.mxu0 0
    %597 = vmatprep.subr.bf16.mxu0 0
    %598 = vmatpush1.bf16.msra.mxu0 0
    %599 = vmatprep.subr.bf16.mxu0 0
    %600 = vmatpush1.bf16.msra.mxu0 0
    %601 = vmatprep.subr.bf16.mxu0 0
    %602 = vmatpush1.bf16.msra.mxu0 0
    %603 = vmatprep.subr.bf16.mxu0 0
    %604 = vmatpush1.bf16.msra.mxu0 0
    %605 = vmatprep.subr.bf16.mxu0 0
    %606 = vmatpush1.bf16.msra.mxu0 0
    %607 = vmatprep.subr.bf16.mxu0 0
    %608 = vmatpush1.bf16.msra.mxu0 0
    %609 = vmatprep.mubr.bf16.mxu0 0
    %610 = vmatmul.mubr.bf16.gmra.mrb[0].mxu0 %v575
    %v611 = vpop.f32.mrb[0].mxu0
    %v612 = vadd.f32 0.0, %v611
    %v613 = vpop.f32.mrb[0].mxu0
    %v614 = vpop.f32.mrb[0].mxu0
    %v615 = vpop.f32.mrb[0].mxu0
    %616 = vdwg.mxu0
    %618 = vrot.lane.b32.xlu0 %v612, 64
    %v619 = vpop.permute.xlu0 %618
    %v621 = vadd.f32 %v129, %v619
    %v622 = vmax.f32 %v621, 0.0
    %v623 = vpack.c.bf16 %v622, %v622
    %vm624 = vcmask 519171
    %625 = vst.msk [vmem:[#allocation2] sm:$0x8] %vm624, %v570
    %v627 = vrot.slane %v623, 4
    %vm629 = vcmask 1044996
    %630 = vst.msk [vmem:[#allocation2] sm:$0x10] %vm629, %v627
    %v632 = vrot.slane %v570, 3
    %v634 = vsel %vm172, %v632, 0
    %636 = vmatprep.subr.bf16.mxu0 0
    %637 = vmatpush1.bf16.msra.mxu0 %v164
    %638 = vmatprep.subr.bf16.mxu0 0
    %639 = vmatpush1.bf16.msra.mxu0 %v165
    %640 = vmatprep.subr.bf16.mxu0 0
    %641 = vmatpush1.bf16.msra.mxu0 %v166
    %642 = vmatprep.subr.bf16.mxu0 0
    %643 = vmatpush1.bf16.msra.mxu0 %v167
    %644 = vmatprep.subr.bf16.mxu0 0
    %645 = vmatpush1.bf16.msra.mxu0 0
    %646 = vmatprep.subr.bf16.mxu0 0
    %647 = vmatpush1.bf16.msra.mxu0 0
    %648 = vmatprep.subr.bf16.mxu0 0
    %649 = vmatpush1.bf16.msra.mxu0 0
    %650 = vmatprep.subr.bf16.mxu0 0
    %651 = vmatpush1.bf16.msra.mxu0 0
    %652 = vmatprep.subr.bf16.mxu0 0
    %653 = vmatpush1.bf16.msra.mxu0 0
    %654 = vmatprep.subr.bf16.mxu0 0
    %655 = vmatpush1.bf16.msra.mxu0 0
    %656 = vmatprep.subr.bf16.mxu0 0
    %657 = vmatpush1.bf16.msra.mxu0 0
    %658 = vmatprep.subr.bf16.mxu0 0
    %659 = vmatpush1.bf16.msra.mxu0 0
    %660 = vmatprep.subr.bf16.mxu0 0
    %661 = vmatpush1.bf16.msra.mxu0 0
    %662 = vmatprep.subr.bf16.mxu0 0
    %663 = vmatpush1.bf16.msra.mxu0 0
    %664 = vmatprep.subr.bf16.mxu0 0
    %665 = vmatpush1.bf16.msra.mxu0 0
    %666 = vmatprep.subr.bf16.mxu0 0
    %667 = vmatpush1.bf16.msra.mxu0 0
    %668 = vmatprep.mubr.bf16.mxu0 0
    %669 = vmatmul.mubr.bf16.gmra.mrb[0].mxu0 %v634
    %v670 = vpop.f32.mrb[0].mxu0
    %v671 = vadd.f32 0.0, %v670
    %v672 = vpop.f32.mrb[0].mxu0
    %v673 = vpop.f32.mrb[0].mxu0
    %v674 = vpop.f32.mrb[0].mxu0
    %675 = vdwg.mxu0
    %v676 = vadd.f32 %v129, %v671
    %v677 = vmax.f32 %v676, 0.0
    %v678 = vpack.c.bf16 %v677, %v677
    %679 = vrot.lane.b32.xlu0 %v623, 64
    %v680 = vpop.permute.xlu0 %679
    %v682 = vsel %vm172, %v680, 0
    %684 = vmatprep.subr.bf16.mxu0 0
    %685 = vmatpush1.bf16.msra.mxu0 %v235
    %686 = vmatprep.subr.bf16.mxu0 0
    %687 = vmatpush1.bf16.msra.mxu0 %v236
    %688 = vmatprep.subr.bf16.mxu0 0
    %689 = vmatpush1.bf16.msra.mxu0 %v237
    %690 = vmatprep.subr.bf16.mxu0 0
    %691 = vmatpush1.bf16.msra.mxu0 %v238
    %692 = vmatprep.subr.bf16.mxu0 0
    %693 = vmatpush1.bf16.msra.mxu0 0
    %694 = vmatprep.subr.bf16.mxu0 0
    %695 = vmatpush1.bf16.msra.mxu0 0
    %696 = vmatprep.subr.bf16.mxu0 0
    %697 = vmatpush1.bf16.msra.mxu0 0
    %698 = vmatprep.subr.bf16.mxu0 0
    %699 = vmatpush1.bf16.msra.mxu0 0
    %700 = vmatprep.subr.bf16.mxu0 0
    %701 = vmatpush1.bf16.msra.mxu0 0
    %702 = vmatprep.subr.bf16.mxu0 0
    %703 = vmatpush1.bf16.msra.mxu0 0
    %704 = vmatprep.subr.bf16.mxu0 0
    %705 = vmatpush1.bf16.msra.mxu0 0
    %706 = vmatprep.subr.bf16.mxu0 0
    %707 = vmatpush1.bf16.msra.mxu0 0
    %708 = vmatprep.subr.bf16.mxu0 0
    %709 = vmatpush1.bf16.msra.mxu0 0
    %710 = vmatprep.subr.bf16.mxu0 0
    %711 = vmatpush1.bf16.msra.mxu0 0
    %712 = vmatprep.subr.bf16.mxu0 0
    %713 = vmatpush1.bf16.msra.mxu0 0
    %714 = vmatprep.subr.bf16.mxu0 0
    %715 = vmatpush1.bf16.msra.mxu0 0
    %716 = vmatprep.mubr.bf16.mxu0 0
    %717 = vmatmul.mubr.bf16.gmra.mrb[0].mxu0 %v682
    %v718 = vpop.f32.mrb[0].mxu0
    %v719 = vadd.f32 0.0, %v718
    %v720 = vpop.f32.mrb[0].mxu0
    %v721 = vpop.f32.mrb[0].mxu0
    %v722 = vpop.f32.mrb[0].mxu0
    %723 = vdwg.mxu0
    %v725 = vrot.slane %v719, 2
    %726 = vrot.lane.b32.xlu0 %v725, 64
    %v727 = vpop.permute.xlu0 %726
    %v729 = vadd.f32 %v126, %v727
    %v730 = vmax.f32 %v729, 0.0
    %v731 = vpack.c.bf16 %v730, %v730
    %v733 = vrot.slane %v678, 4
    %vm735 = vcmask 520196
    %736 = vst.msk [vmem:[#allocation2] sm:$0x10] %vm735, %v733
    %vm737 = vcmask 1043971
    %738 = vst.msk [vmem:[#allocation2] sm:$0x8] %vm737, %v731
    %v740 = vsel %vm172, %v678, 0
    %742 = vmatprep.subr.bf16.mxu0 0
    %743 = vmatpush1.bf16.msra.mxu0 %v164
    %744 = vmatprep.subr.bf16.mxu0 0
    %745 = vmatpush1.bf16.msra.mxu0 %v165
    %746 = vmatprep.subr.bf16.mxu0 0
    %747 = vmatpush1.bf16.msra.mxu0 %v166
    %748 = vmatprep.subr.bf16.mxu0 0
    %749 = vmatpush1.bf16.msra.mxu0 %v167
    %750 = vmatprep.subr.bf16.mxu0 0
    %751 = vmatpush1.bf16.msra.mxu0 0
    %752 = vmatprep.subr.bf16.mxu0 0
    %753 = vmatpush1.bf16.msra.mxu0 0
    %754 = vmatprep.subr.bf16.mxu0 0
    %755 = vmatpush1.bf16.msra.mxu0 0
    %756 = vmatprep.subr.bf16.mxu0 0
    %757 = vmatpush1.bf16.msra.mxu0 0
    %758 = vmatprep.subr.bf16.mxu0 0
    %759 = vmatpush1.bf16.msra.mxu0 0
    %760 = vmatprep.subr.bf16.mxu0 0
    %761 = vmatpush1.bf16.msra.mxu0 0
    %762 = vmatprep.subr.bf16.mxu0 0
    %763 = vmatpush1.bf16.msra.mxu0 0
    %764 = vmatprep.subr.bf16.mxu0 0
    %765 = vmatpush1.bf16.msra.mxu0 0
    %766 = vmatprep.subr.bf16.mxu0 0
    %767 = vmatpush1.bf16.msra.mxu0 0
    %768 = vmatprep.subr.bf16.mxu0 0
    %769 = vmatpush1.bf16.msra.mxu0 0
    %770 = vmatprep.subr.bf16.mxu0 0
    %771 = vmatpush1.bf16.msra.mxu0 0
    %772 = vmatprep.subr.bf16.mxu0 0
    %773 = vmatpush1.bf16.msra.mxu0 0
    %774 = vmatprep.mubr.bf16.mxu0 0
    %775 = vmatmul.mubr.bf16.gmra.mrb[0].mxu0 %v740
    %v776 = vpop.f32.mrb[0].mxu0
    %v777 = vadd.f32 0.0, %v776
    %v778 = vpop.f32.mrb[0].mxu0
    %v779 = vpop.f32.mrb[0].mxu0
    %v780 = vpop.f32.mrb[0].mxu0
    %781 = vdwg.mxu0
    %v783 = vrot.slane %v777, 6
    %v785 = vadd.f32 %v129, %v783
    %v786 = vmax.f32 %v785, 0.0
    %v787 = vpack.c.bf16 %v786, %v786
    %v789 = vrot.slane %v731, 3
    %790 = vrot.lane.b32.xlu0 %v789, 64
    %v791 = vpop.permute.xlu0 %790
    %v793 = vsel %vm172, %v791, 0
    %795 = vmatprep.subr.bf16.mxu0 0
    %796 = vmatpush1.bf16.msra.mxu0 %v235
    %797 = vmatprep.subr.bf16.mxu0 0
    %798 = vmatpush1.bf16.msra.mxu0 %v236
    %799 = vmatprep.subr.bf16.mxu0 0
    %800 = vmatpush1.bf16.msra.mxu0 %v237
    %801 = vmatprep.subr.bf16.mxu0 0
    %802 = vmatpush1.bf16.msra.mxu0 %v238
    %803 = vmatprep.subr.bf16.mxu0 0
    %804 = vmatpush1.bf16.msra.mxu0 0
    %805 = vmatprep.subr.bf16.mxu0 0
    %806 = vmatpush1.bf16.msra.mxu0 0
    %807 = vmatprep.subr.bf16.mxu0 0
    %808 = vmatpush1.bf16.msra.mxu0 0
    %809 = vmatprep.subr.bf16.mxu0 0
    %810 = vmatpush1.bf16.msra.mxu0 0
    %811 = vmatprep.subr.bf16.mxu0 0
    %812 = vmatpush1.bf16.msra.mxu0 0
    %813 = vmatprep.subr.bf16.mxu0 0
    %814 = vmatpush1.bf16.msra.mxu0 0
    %815 = vmatprep.subr.bf16.mxu0 0
    %816 = vmatpush1.bf16.msra.mxu0 0
    %817 = vmatprep.subr.bf16.mxu0 0
    %818 = vmatpush1.bf16.msra.mxu0 0
    %819 = vmatprep.subr.bf16.mxu0 0
    %820 = vmatpush1.bf16.msra.mxu0 0
    %821 = vmatprep.subr.bf16.mxu0 0
    %822 = vmatpush1.bf16.msra.mxu0 0
    %823 = vmatprep.subr.bf16.mxu0 0
    %824 = vmatpush1.bf16.msra.mxu0 0
    %825 = vmatprep.subr.bf16.mxu0 0
    %826 = vmatpush1.bf16.msra.mxu0 0
    %827 = vmatprep.mubr.bf16.mxu0 0
    %828 = vmatmul.mubr.bf16.gmra.mrb[0].mxu0 %v793
    %v829 = vpop.f32.mrb[0].mxu0
    %v830 = vadd.f32 0.0, %v829
    %v831 = vpop.f32.mrb[0].mxu0
    %v832 = vpop.f32.mrb[0].mxu0
    %v833 = vpop.f32.mrb[0].mxu0
    %834 = vdwg.mxu0
    %v836 = vrot.slane %v830, 4
    %837 = vrot.lane.b32.xlu0 %v836, 64
    %v838 = vpop.permute.xlu0 %837
    %v840 = vadd.f32 %v126, %v838
    %v841 = vmax.f32 %v840, 0.0
    %v842 = vpack.c.bf16 %v841, %v841
    %v844 = vrot.slane %v787, 4
    %vm846 = vcmask 521221
    %847 = vst.msk [vmem:[#allocation2] sm:$0x20] %vm846, %v844
    %vm848 = vcmask 1042946
    %849 = vst.msk [vmem:[#allocation2] sm:$0x4] %vm848, %v842
    %v850 = vrot.slane %v787, 1
    %v852 = vsel %vm172, %v850, 0
    %854 = vmatprep.subr.bf16.mxu0 0
    %855 = vmatpush1.bf16.msra.mxu0 %v164
    %856 = vmatprep.subr.bf16.mxu0 0
    %857 = vmatpush1.bf16.msra.mxu0 %v165
    %858 = vmatprep.subr.bf16.mxu0 0
    %859 = vmatpush1.bf16.msra.mxu0 %v166
    %860 = vmatprep.subr.bf16.mxu0 0
    %861 = vmatpush1.bf16.msra.mxu0 %v167
    %862 = vmatprep.subr.bf16.mxu0 0
    %863 = vmatpush1.bf16.msra.mxu0 0
    %864 = vmatprep.subr.bf16.mxu0 0
    %865 = vmatpush1.bf16.msra.mxu0 0
    %866 = vmatprep.subr.bf16.mxu0 0
    %867 = vmatpush1.bf16.msra.mxu0 0
    %868 = vmatprep.subr.bf16.mxu0 0
    %869 = vmatpush1.bf16.msra.mxu0 0
    %870 = vmatprep.subr.bf16.mxu0 0
    %871 = vmatpush1.bf16.msra.mxu0 0
    %872 = vmatprep.subr.bf16.mxu0 0
    %873 = vmatpush1.bf16.msra.mxu0 0
    %874 = vmatprep.subr.bf16.mxu0 0
    %875 = vmatpush1.bf16.msra.mxu0 0
    %876 = vmatprep.subr.bf16.mxu0 0
    %877 = vmatpush1.bf16.msra.mxu0 0
    %878 = vmatprep.subr.bf16.mxu0 0
    %879 = vmatpush1.bf16.msra.mxu0 0
    %880 = vmatprep.subr.bf16.mxu0 0
    %881 = vmatpush1.bf16.msra.mxu0 0
    %882 = vmatprep.subr.bf16.mxu0 0
    %883 = vmatpush1.bf16.msra.mxu0 0
    %884 = vmatprep.subr.bf16.mxu0 0
    %885 = vmatpush1.bf16.msra.mxu0 0
    %886 = vmatprep.mubr.bf16.mxu0 0
    %887 = vmatmul.mubr.bf16.gmra.mrb[0].mxu0 %v852
    %v888 = vpop.f32.mrb[0].mxu0
    %v889 = vadd.f32 0.0, %v888
    %v890 = vpop.f32.mrb[0].mxu0
    %v891 = vpop.f32.mrb[0].mxu0
    %v892 = vpop.f32.mrb[0].mxu0
    %893 = vdwg.mxu0
    %v895 = vrot.slane %v889, 4
    %v897 = vadd.f32 %v129, %v895
    %v898 = vmax.f32 %v897, 0.0
    %v899 = vpack.c.bf16 %v898, %v898
    %v901 = vrot.slane %v842, 2
    %902 = vrot.lane.b32.xlu0 %v901, 64
    %v903 = vpop.permute.xlu0 %902
    %v905 = vsel %vm172, %v903, 0
    %907 = vmatprep.subr.bf16.mxu0 0
    %908 = vmatpush1.bf16.msra.mxu0 %v235
    %909 = vmatprep.subr.bf16.mxu0 0
    %910 = vmatpush1.bf16.msra.mxu0 %v236
    %911 = vmatprep.subr.bf16.mxu0 0
    %912 = vmatpush1.bf16.msra.mxu0 %v237
    %913 = vmatprep.subr.bf16.mxu0 0
    %914 = vmatpush1.bf16.msra.mxu0 %v238
    %915 = vmatprep.subr.bf16.mxu0 0
    %916 = vmatpush1.bf16.msra.mxu0 0
    %917 = vmatprep.subr.bf16.mxu0 0
    %918 = vmatpush1.bf16.msra.mxu0 0
    %919 = vmatprep.subr.bf16.mxu0 0
    %920 = vmatpush1.bf16.msra.mxu0 0
    %921 = vmatprep.subr.bf16.mxu0 0
    %922 = vmatpush1.bf16.msra.mxu0 0
    %923 = vmatprep.subr.bf16.mxu0 0
    %924 = vmatpush1.bf16.msra.mxu0 0
    %925 = vmatprep.subr.bf16.mxu0 0
    %926 = vmatpush1.bf16.msra.mxu0 0
    %927 = vmatprep.subr.bf16.mxu0 0
    %928 = vmatpush1.bf16.msra.mxu0 0
    %929 = vmatprep.subr.bf16.mxu0 0
    %930 = vmatpush1.bf16.msra.mxu0 0
    %931 = vmatprep.subr.bf16.mxu0 0
    %932 = vmatpush1.bf16.msra.mxu0 0
    %933 = vmatprep.subr.bf16.mxu0 0
    %934 = vmatpush1.bf16.msra.mxu0 0
    %935 = vmatprep.subr.bf16.mxu0 0
    %936 = vmatpush1.bf16.msra.mxu0 0
    %937 = vmatprep.subr.bf16.mxu0 0
    %938 = vmatpush1.bf16.msra.mxu0 0
    %939 = vmatprep.mubr.bf16.mxu0 0
    %940 = vmatmul.mubr.bf16.gmra.mrb[0].mxu0 %v905
    %v941 = vpop.f32.mrb[0].mxu0
    %v942 = vadd.f32 0.0, %v941
    %v943 = vpop.f32.mrb[0].mxu0
    %v944 = vpop.f32.mrb[0].mxu0
    %v945 = vpop.f32.mrb[0].mxu0
    %946 = vdwg.mxu0
    %v948 = vrot.slane %v942, 6
    %949 = vrot.lane.b32.xlu0 %v948, 64
    %v950 = vpop.permute.xlu0 %949
    %v952 = vadd.f32 %v126, %v950
    %v953 = vmax.f32 %v952, 0.0
    %v954 = vpack.c.bf16 %v953, %v953
    %v956 = vrot.slane %v899, 4
    %vm958 = vcmask 522246
    %959 = vst.msk [vmem:[#allocation2] sm:$0x40] %vm958, %v956
    %vm960 = vcmask 1041921
    %961 = vst.msk [vmem:[#allocation2] sm:$0x2] %vm960, %v954
    %v962 = vrot.slane %v899, 2
    %v964 = vsel %vm172, %v962, 0
    %966 = vmatprep.subr.bf16.mxu0 0
    %967 = vmatpush1.bf16.msra.mxu0 %v164
    %968 = vmatprep.subr.bf16.mxu0 0
    %969 = vmatpush1.bf16.msra.mxu0 %v165
    %970 = vmatprep.subr.bf16.mxu0 0
    %971 = vmatpush1.bf16.msra.mxu0 %v166
    %972 = vmatprep.subr.bf16.mxu0 0
    %973 = vmatpush1.bf16.msra.mxu0 %v167
    %974 = vmatprep.subr.bf16.mxu0 0
    %975 = vmatpush1.bf16.msra.mxu0 0
    %976 = vmatprep.subr.bf16.mxu0 0
    %977 = vmatpush1.bf16.msra.mxu0 0
    %978 = vmatprep.subr.bf16.mxu0 0
    %979 = vmatpush1.bf16.msra.mxu0 0
    %980 = vmatprep.subr.bf16.mxu0 0
    %981 = vmatpush1.bf16.msra.mxu0 0
    %982 = vmatprep.subr.bf16.mxu0 0
    %983 = vmatpush1.bf16.msra.mxu0 0
    %984 = vmatprep.subr.bf16.mxu0 0
    %985 = vmatpush1.bf16.msra.mxu0 0
    %986 = vmatprep.subr.bf16.mxu0 0
    %987 = vmatpush1.bf16.msra.mxu0 0
    %988 = vmatprep.subr.bf16.mxu0 0
    %989 = vmatpush1.bf16.msra.mxu0 0
    %990 = vmatprep.subr.bf16.mxu0 0
    %991 = vmatpush1.bf16.msra.mxu0 0
    %992 = vmatprep.subr.bf16.mxu0 0
    %993 = vmatpush1.bf16.msra.mxu0 0
    %994 = vmatprep.subr.bf16.mxu0 0
    %995 = vmatpush1.bf16.msra.mxu0 0
    %996 = vmatprep.subr.bf16.mxu0 0
    %997 = vmatpush1.bf16.msra.mxu0 0
    %998 = vmatprep.mubr.bf16.mxu0 0
    %999 = vmatmul.mubr.bf16.gmra.mrb[0].mxu0 %v964
    %v1000 = vpop.f32.mrb[0].mxu0
    %v1001 = vadd.f32 0.0, %v1000
    %v1002 = vpop.f32.mrb[0].mxu0
    %v1003 = vpop.f32.mrb[0].mxu0
    %v1004 = vpop.f32.mrb[0].mxu0
    %1005 = vdwg.mxu0
    %v1007 = vrot.slane %v1001, 2
    %v1009 = vadd.f32 %v129, %v1007
    %v1010 = vmax.f32 %v1009, 0.0
    %v1011 = vpack.c.bf16 %v1010, %v1010
    %v1013 = vrot.slane %v954, 1
    %1014 = vrot.lane.b32.xlu0 %v1013, 64
    %v1015 = vpop.permute.xlu0 %1014
    %v1017 = vsel %vm172, %v1015, 0
    %1019 = vmatprep.subr.bf16.mxu0 0
    %1020 = vmatpush1.bf16.msra.mxu0 %v235
    %1021 = vmatprep.subr.bf16.mxu0 0
    %1022 = vmatpush1.bf16.msra.mxu0 %v236
    %1023 = vmatprep.subr.bf16.mxu0 0
    %1024 = vmatpush1.bf16.msra.mxu0 %v237
    %1025 = vmatprep.subr.bf16.mxu0 0
    %1026 = vmatpush1.bf16.msra.mxu0 %v238
    %1027 = vmatprep.subr.bf16.mxu0 0
    %1028 = vmatpush1.bf16.msra.mxu0 0
    %1029 = vmatprep.subr.bf16.mxu0 0
    %1030 = vmatpush1.bf16.msra.mxu0 0
    %1031 = vmatprep.subr.bf16.mxu0 0
    %1032 = vmatpush1.bf16.msra.mxu0 0
    %1033 = vmatprep.subr.bf16.mxu0 0
    %1034 = vmatpush1.bf16.msra.mxu0 0
    %1035 = vmatprep.subr.bf16.mxu0 0
    %1036 = vmatpush1.bf16.msra.mxu0 0
    %1037 = vmatprep.subr.bf16.mxu0 0
    %1038 = vmatpush1.bf16.msra.mxu0 0
    %1039 = vmatprep.subr.bf16.mxu0 0
    %1040 = vmatpush1.bf16.msra.mxu0 0
    %1041 = vmatprep.subr.bf16.mxu0 0
    %1042 = vmatpush1.bf16.msra.mxu0 0
    %1043 = vmatprep.subr.bf16.mxu0 0
    %1044 = vmatpush1.bf16.msra.mxu0 0
    %1045 = vmatprep.subr.bf16.mxu0 0
    %1046 = vmatpush1.bf16.msra.mxu0 0
    %1047 = vmatprep.subr.bf16.mxu0 0
    %1048 = vmatpush1.bf16.msra.mxu0 0
    %1049 = vmatprep.subr.bf16.mxu0 0
    %1050 = vmatpush1.bf16.msra.mxu0 0
    %1051 = vmatprep.mubr.bf16.mxu0 0
    %1052 = vmatmul.mubr.bf16.gmra.mrb[0].mxu0 %v1017
    %v1053 = vpop.f32.mrb[0].mxu0
    %v1054 = vadd.f32 0.0, %v1053
    %v1055 = vpop.f32.mrb[0].mxu0
    %v1056 = vpop.f32.mrb[0].mxu0
    %v1057 = vpop.f32.mrb[0].mxu0
    %1058 = vdwg.mxu0
    %1060 = vrot.lane.b32.xlu0 %v1054, 64
    %v1061 = vpop.permute.xlu0 %1060
    %v1063 = vadd.f32 %v126, %v1061
    %v1064 = vmax.f32 %v1063, 0.0
    %v1065 = vpack.c.bf16 %v1064, %v1064
    %v1067 = vrot.slane %v1011, 4
    %vm1069 = vcmask 523271
    %1070 = vst.msk [vmem:[#allocation2] sm:$0x80] %vm1069, %v1067
    %vm1071 = vcmask 1040896
    %1072 = vst.msk [vmem:[#allocation2] sm:$0x1] %vm1071, %v1065
    %v1073 = vld [vmem:[#allocation2] sm:$0xff]
    %v1074 = vld [vmem:[%s5] sm:$0xf]
    %v1075 = vld [vmem:[%s5 + $0x4] sm:$0xf]
    %v1076 = vld [vmem:[%s5 + $0x8] sm:$0xf]
    %v1077 = vld [vmem:[%s5 + $0xc] sm:$0xf]
    %v1078 = vld [vmem:[%s5 + $0x10] sm:$0xf]
    %v1079 = vld [vmem:[%s5 + $0x14] sm:$0xf]
    %v1080 = vld [vmem:[%s5 + $0x18] sm:$0xf]
    %v1081 = vld [vmem:[%s5 + $0x1c] sm:$0xf]
    %v1082 = vld [vmem:[%s5 + $0x20] sm:$0xf]
    %v1083 = vld [vmem:[%s5 + $0x24] sm:$0xf]
    %v1084 = vld [vmem:[%s5 + $0x28] sm:$0xf]
    %v1085 = vld [vmem:[%s5 + $0x2c] sm:$0xf]
    %v1086 = vld [vmem:[%s5 + $0x30] sm:$0xf]
    %v1087 = vld [vmem:[%s5 + $0x34] sm:$0xf]
    %v1088 = vld [vmem:[%s5 + $0x38] sm:$0xf]
    %v1089 = vld [vmem:[%s5 + $0x3c] sm:$0xf]
    %v1090 = vld [vmem:[%s6] sm:$0x1]
    %v1091 = vunpack.c.l.bf16 %v1090
    %v1092 = vlaneseq
    %v1093 = vshrl.u32 %v1092, 7
    %v1094 = vsub.s32 0, %v1093
    %v1095 = vrot.slane %v1091, %v1094
    %v1112 = vunpack.c.l.b16 %v1074
    %v1113 = vunpack.c.l.b16 %v1075
    %v1114 = vunpack.c.l.b16 %v1076
    %v1115 = vunpack.c.l.b16 %v1077
    %v1116 = vunpack.c.l.b16 %v1078
    %v1117 = vunpack.c.l.b16 %v1079
    %v1118 = vunpack.c.l.b16 %v1080
    %v1119 = vunpack.c.l.b16 %v1081
    %v1120 = vunpack.c.l.b16 %v1082
    %v1121 = vunpack.c.l.b16 %v1083
    %v1122 = vunpack.c.l.b16 %v1084
    %v1123 = vunpack.c.l.b16 %v1085
    %v1124 = vunpack.c.l.b16 %v1086
    %v1125 = vunpack.c.l.b16 %v1087
    %v1126 = vunpack.c.l.b16 %v1088
    %v1127 = vunpack.c.l.b16 %v1089
    %v1128 = vpack.c.b16 %v1113, %v1112
    %v1129 = vpack.c.b16 %v1115, %v1114
    %v1130 = vpack.c.b16 %v1117, %v1116
    %v1131 = vpack.c.b16 %v1119, %v1118
    %v1132 = vpack.c.b16 %v1121, %v1120
    %v1133 = vpack.c.b16 %v1123, %v1122
    %v1134 = vpack.c.b16 %v1125, %v1124
    %v1135 = vpack.c.b16 %v1127, %v1126
    %1144 = vmatprep.subr.bf16.mxu0 0
    %1145 = vmatpush1.bf16.msra.mxu0 %v1128
    %1146 = vmatprep.subr.bf16.mxu0 0
    %1147 = vmatpush1.bf16.msra.mxu0 %v1129
    %1148 = vmatprep.subr.bf16.mxu0 0
    %1149 = vmatpush1.bf16.msra.mxu0 %v1130
    %1150 = vmatprep.subr.bf16.mxu0 0
    %1151 = vmatpush1.bf16.msra.mxu0 %v1131
    %1152 = vmatprep.subr.bf16.mxu0 0
    %1153 = vmatpush1.bf16.msra.mxu0 %v1132
    %1154 = vmatprep.subr.bf16.mxu0 0
    %1155 = vmatpush1.bf16.msra.mxu0 %v1133
    %1156 = vmatprep.subr.bf16.mxu0 0
    %1157 = vmatpush1.bf16.msra.mxu0 %v1134
    %1158 = vmatprep.subr.bf16.mxu0 0
    %1159 = vmatpush1.bf16.msra.mxu0 %v1135
    %1160 = vmatprep.subr.bf16.mxu0 0
    %1161 = vmatpush1.bf16.msra.mxu0 0
    %1162 = vmatprep.subr.bf16.mxu0 0
    %1163 = vmatpush1.bf16.msra.mxu0 0
    %1164 = vmatprep.subr.bf16.mxu0 0
    %1165 = vmatpush1.bf16.msra.mxu0 0
    %1166 = vmatprep.subr.bf16.mxu0 0
    %1167 = vmatpush1.bf16.msra.mxu0 0
    %1168 = vmatprep.subr.bf16.mxu0 0
    %1169 = vmatpush1.bf16.msra.mxu0 0
    %1170 = vmatprep.subr.bf16.mxu0 0
    %1171 = vmatpush1.bf16.msra.mxu0 0
    %1172 = vmatprep.subr.bf16.mxu0 0
    %1173 = vmatpush1.bf16.msra.mxu0 0
    %1174 = vmatprep.subr.bf16.mxu0 0
    %1175 = vmatpush1.bf16.msra.mxu0 0
    %1176 = vmatprep.mubr.bf16.mxu0 0
    %1177 = vmatmul.mubr.bf16.gmra.mrb[0].mxu0 %v1073
    %v1178 = vpop.f32.mrb[0].mxu0
    %v1179 = vadd.f32 %v1095, %v1178
    %v1180 = vpop.f32.mrb[0].mxu0
    %v1181 = vpop.f32.mrb[0].mxu0
    %v1182 = vadd.f32 %v1095, %v1181
    %v1183 = vpop.f32.mrb[0].mxu0
    %1184 = vdwg.mxu0
    %v1185 = vld [vmem:[%s7] sm:$0xf]
    %v1186 = vld [vmem:[%s7 + $0x4] sm:$0xf]
    %v1187 = vld [vmem:[%s7 + $0x8] sm:$0xf]
    %v1188 = vld [vmem:[%s7 + $0xc] sm:$0xf]
    %v1189 = vld [vmem:[%s7 + $0x10] sm:$0xf]
    %v1190 = vld [vmem:[%s7 + $0x14] sm:$0xf]
    %v1191 = vld [vmem:[%s7 + $0x18] sm:$0xf]
    %v1192 = vld [vmem:[%s7 + $0x1c] sm:$0xf]
    %v1193 = vld [vmem:[%s8] sm:$0xf]
    %v1194 = vld [vmem:[%s8 + $0x4] sm:$0xf]
    %v1195 = vld [vmem:[%s8 + $0x8] sm:$0xf]
    %v1196 = vld [vmem:[%s8 + $0xc] sm:$0xf]
    %v1197 = vld [vmem:[%s8 + $0x10] sm:$0xf]
    %v1198 = vld [vmem:[%s8 + $0x14] sm:$0xf]
    %v1199 = vld [vmem:[%s8 + $0x18] sm:$0xf]
    %v1200 = vld [vmem:[%s8 + $0x1c] sm:$0xf]
    %v1209 = vunpack.c.l.b16 %v1185
    %v1210 = vunpack.c.l.b16 %v1186
    %v1211 = vunpack.c.l.b16 %v1187
    %v1212 = vunpack.c.l.b16 %v1188
    %v1213 = vunpack.c.l.b16 %v1189
    %v1214 = vunpack.c.l.b16 %v1190
    %v1215 = vunpack.c.l.b16 %v1191
    %v1216 = vunpack.c.l.b16 %v1192
    %v1217 = vpack.c.b16 %v1210, %v1209
    %v1218 = vpack.c.b16 %v1212, %v1211
    %v1219 = vpack.c.b16 %v1214, %v1213
    %v1220 = vpack.c.b16 %v1216, %v1215
    %1225 = vmatprep.subr.bf16.mxu0 0
    %1226 = vmatpush1.bf16.msra.mxu0 %v1217
    %1227 = vmatprep.subr.bf16.mxu0 0
    %1228 = vmatpush1.bf16.msra.mxu0 %v1218
    %1229 = vmatprep.subr.bf16.mxu0 0
    %1230 = vmatpush1.bf16.msra.mxu0 %v1219
    %1231 = vmatprep.subr.bf16.mxu0 0
    %1232 = vmatpush1.bf16.msra.mxu0 %v1220
    %1233 = vmatprep.subr.bf16.mxu0 0
    %1234 = vmatpush1.bf16.msra.mxu0 0
    %1235 = vmatprep.subr.bf16.mxu0 0
    %1236 = vmatpush1.bf16.msra.mxu0 0
    %1237 = vmatprep.subr.bf16.mxu0 0
    %1238 = vmatpush1.bf16.msra.mxu0 0
    %1239 = vmatprep.subr.bf16.mxu0 0
    %1240 = vmatpush1.bf16.msra.mxu0 0
    %1241 = vmatprep.subr.bf16.mxu0 0
    %1242 = vmatpush1.bf16.msra.mxu0 0
    %1243 = vmatprep.subr.bf16.mxu0 0
    %1244 = vmatpush1.bf16.msra.mxu0 0
    %1245 = vmatprep.subr.bf16.mxu0 0
    %1246 = vmatpush1.bf16.msra.mxu0 0
    %1247 = vmatprep.subr.bf16.mxu0 0
    %1248 = vmatpush1.bf16.msra.mxu0 0
    %1249 = vmatprep.subr.bf16.mxu0 0
    %1250 = vmatpush1.bf16.msra.mxu0 0
    %1251 = vmatprep.subr.bf16.mxu0 0
    %1252 = vmatpush1.bf16.msra.mxu0 0
    %1253 = vmatprep.subr.bf16.mxu0 0
    %1254 = vmatpush1.bf16.msra.mxu0 0
    %1255 = vmatprep.subr.bf16.mxu0 0
    %1256 = vmatpush1.bf16.msra.mxu0 0
    %1257 = vmatprep.mubr.bf16.mxu0 0
    %1258 = vmatmul.mubr.bf16.gmra.mrb[0].mxu0 %v174
    %v1259 = vpop.f32.mrb[0].mxu0
    %v1260 = vadd.f32 0.0, %v1259
    %v1261 = vpop.f32.mrb[0].mxu0
    %v1262 = vpop.f32.mrb[0].mxu0
    %v1263 = vpop.f32.mrb[0].mxu0
    %1264 = vdwg.mxu0
    %v1265 = vadd.f32 %v1179, %v1260
    %v1266 = vmax.f32 %v1265, 0.0
    %v1267 = vpack.c.bf16 %v1266, %v1266
    %v1276 = vunpack.c.l.b16 %v1193
    %v1277 = vunpack.c.l.b16 %v1194
    %v1278 = vunpack.c.l.b16 %v1195
    %v1279 = vunpack.c.l.b16 %v1196
    %v1280 = vunpack.c.l.b16 %v1197
    %v1281 = vunpack.c.l.b16 %v1198
    %v1282 = vunpack.c.l.b16 %v1199
    %v1283 = vunpack.c.l.b16 %v1200
    %v1284 = vpack.c.b16 %v1277, %v1276
    %v1285 = vpack.c.b16 %v1279, %v1278
    %v1286 = vpack.c.b16 %v1281, %v1280
    %v1287 = vpack.c.b16 %v1283, %v1282
    %1292 = vmatprep.subr.bf16.mxu0 0
    %1293 = vmatpush1.bf16.msra.mxu0 %v1284
    %1294 = vmatprep.subr.bf16.mxu0 0
    %1295 = vmatpush1.bf16.msra.mxu0 %v1285
    %1296 = vmatprep.subr.bf16.mxu0 0
    %1297 = vmatpush1.bf16.msra.mxu0 %v1286
    %1298 = vmatprep.subr.bf16.mxu0 0
    %1299 = vmatpush1.bf16.msra.mxu0 %v1287
    %1300 = vmatprep.subr.bf16.mxu0 0
    %1301 = vmatpush1.bf16.msra.mxu0 0
    %1302 = vmatprep.subr.bf16.mxu0 0
    %1303 = vmatpush1.bf16.msra.mxu0 0
    %1304 = vmatprep.subr.bf16.mxu0 0
    %1305 = vmatpush1.bf16.msra.mxu0 0
    %1306 = vmatprep.subr.bf16.mxu0 0
    %1307 = vmatpush1.bf16.msra.mxu0 0
    %1308 = vmatprep.subr.bf16.mxu0 0
    %1309 = vmatpush1.bf16.msra.mxu0 0
    %1310 = vmatprep.subr.bf16.mxu0 0
    %1311 = vmatpush1.bf16.msra.mxu0 0
    %1312 = vmatprep.subr.bf16.mxu0 0
    %1313 = vmatpush1.bf16.msra.mxu0 0
    %1314 = vmatprep.subr.bf16.mxu0 0
    %1315 = vmatpush1.bf16.msra.mxu0 0
    %1316 = vmatprep.subr.bf16.mxu0 0
    %1317 = vmatpush1.bf16.msra.mxu0 0
    %1318 = vmatprep.subr.bf16.mxu0 0
    %1319 = vmatpush1.bf16.msra.mxu0 0
    %1320 = vmatprep.subr.bf16.mxu0 0
    %1321 = vmatpush1.bf16.msra.mxu0 0
    %1322 = vmatprep.subr.bf16.mxu0 0
    %1323 = vmatpush1.bf16.msra.mxu0 0
    %1324 = vmatprep.mubr.bf16.mxu0 0
    %1325 = vmatmul.mubr.bf16.gmra.mrb[0].mxu0 %v174
    %v1326 = vpop.f32.mrb[0].mxu0
    %v1327 = vadd.f32 0.0, %v1326
    %v1328 = vpop.f32.mrb[0].mxu0
    %v1329 = vpop.f32.mrb[0].mxu0
    %v1330 = vpop.f32.mrb[0].mxu0
    %1331 = vdwg.mxu0
    %v1333 = vrot.slane %v1327, 2
    %1334 = vrot.lane.b32.xlu0 %v1333, 64
    %v1335 = vpop.permute.xlu0 %1334
    %v1337 = vadd.f32 %v1182, %v1335
    %v1338 = vmax.f32 %v1337, 0.0
    %v1339 = vpack.c.bf16 %v1338, %v1338
    %v1341 = vsel %vm172, %v1267, 0
    %1343 = vmatprep.subr.bf16.mxu0 0
    %1344 = vmatpush1.bf16.msra.mxu0 %v1217
    %1345 = vmatprep.subr.bf16.mxu0 0
    %1346 = vmatpush1.bf16.msra.mxu0 %v1218
    %1347 = vmatprep.subr.bf16.mxu0 0
    %1348 = vmatpush1.bf16.msra.mxu0 %v1219
    %1349 = vmatprep.subr.bf16.mxu0 0
    %1350 = vmatpush1.bf16.msra.mxu0 %v1220
    %1351 = vmatprep.subr.bf16.mxu0 0
    %1352 = vmatpush1.bf16.msra.mxu0 0
    %1353 = vmatprep.subr.bf16.mxu0 0
    %1354 = vmatpush1.bf16.msra.mxu0 0
    %1355 = vmatprep.subr.bf16.mxu0 0
    %1356 = vmatpush1.bf16.msra.mxu0 0
    %1357 = vmatprep.subr.bf16.mxu0 0
    %1358 = vmatpush1.bf16.msra.mxu0 0
    %1359 = vmatprep.subr.bf16.mxu0 0
    %1360 = vmatpush1.bf16.msra.mxu0 0
    %1361 = vmatprep.subr.bf16.mxu0 0
    %1362 = vmatpush1.bf16.msra.mxu0 0
    %1363 = vmatprep.subr.bf16.mxu0 0
    %1364 = vmatpush1.bf16.msra.mxu0 0
    %1365 = vmatprep.subr.bf16.mxu0 0
    %1366 = vmatpush1.bf16.msra.mxu0 0
    %1367 = vmatprep.subr.bf16.mxu0 0
    %1368 = vmatpush1.bf16.msra.mxu0 0
    %1369 = vmatprep.subr.bf16.mxu0 0
    %1370 = vmatpush1.bf16.msra.mxu0 0
    %1371 = vmatprep.subr.bf16.mxu0 0
    %1372 = vmatpush1.bf16.msra.mxu0 0
    %1373 = vmatprep.subr.bf16.mxu0 0
    %1374 = vmatpush1.bf16.msra.mxu0 0
    %1375 = vmatprep.mubr.bf16.mxu0 0
    %1376 = vmatmul.mubr.bf16.gmra.mrb[0].mxu0 %v1341
    %v1377 = vpop.f32.mrb[0].mxu0
    %v1378 = vadd.f32 0.0, %v1377
    %v1379 = vpop.f32.mrb[0].mxu0
    %v1380 = vpop.f32.mrb[0].mxu0
    %v1381 = vpop.f32.mrb[0].mxu0
    %1382 = vdwg.mxu0
    %v1384 = vrot.slane %v1378, 6
    %v1386 = vadd.f32 %v1179, %v1384
    %v1387 = vmax.f32 %v1386, 0.0
    %v1388 = vpack.c.bf16 %v1387, %v1387
    %v1390 = vrot.slane %v1339, 3
    %1391 = vrot.lane.b32.xlu0 %v1390, 64
    %v1392 = vpop.permute.xlu0 %1391
    %v1394 = vsel %vm172, %v1392, 0
    %1396 = vmatprep.subr.bf16.mxu0 0
    %1397 = vmatpush1.bf16.msra.mxu0 %v1284
    %1398 = vmatprep.subr.bf16.mxu0 0
    %1399 = vmatpush1.bf16.msra.mxu0 %v1285
    %1400 = vmatprep.subr.bf16.mxu0 0
    %1401 = vmatpush1.bf16.msra.mxu0 %v1286
    %1402 = vmatprep.subr.bf16.mxu0 0
    %1403 = vmatpush1.bf16.msra.mxu0 %v1287
    %1404 = vmatprep.subr.bf16.mxu0 0
    %1405 = vmatpush1.bf16.msra.mxu0 0
    %1406 = vmatprep.subr.bf16.mxu0 0
    %1407 = vmatpush1.bf16.msra.mxu0 0
    %1408 = vmatprep.subr.bf16.mxu0 0
    %1409 = vmatpush1.bf16.msra.mxu0 0
    %1410 = vmatprep.subr.bf16.mxu0 0
    %1411 = vmatpush1.bf16.msra.mxu0 0
    %1412 = vmatprep.subr.bf16.mxu0 0
    %1413 = vmatpush1.bf16.msra.mxu0 0
    %1414 = vmatprep.subr.bf16.mxu0 0
    %1415 = vmatpush1.bf16.msra.mxu0 0
    %1416 = vmatprep.subr.bf16.mxu0 0
    %1417 = vmatpush1.bf16.msra.mxu0 0
    %1418 = vmatprep.subr.bf16.mxu0 0
    %1419 = vmatpush1.bf16.msra.mxu0 0
    %1420 = vmatprep.subr.bf16.mxu0 0
    %1421 = vmatpush1.bf16.msra.mxu0 0
    %1422 = vmatprep.subr.bf16.mxu0 0
    %1423 = vmatpush1.bf16.msra.mxu0 0
    %1424 = vmatprep.subr.bf16.mxu0 0
    %1425 = vmatpush1.bf16.msra.mxu0 0
    %1426 = vmatprep.subr.bf16.mxu0 0
    %1427 = vmatpush1.bf16.msra.mxu0 0
    %1428 = vmatprep.mubr.bf16.mxu0 0
    %1429 = vmatmul.mubr.bf16.gmra.mrb[0].mxu0 %v1394
    %v1430 = vpop.f32.mrb[0].mxu0
    %v1431 = vadd.f32 0.0, %v1430
    %v1432 = vpop.f32.mrb[0].mxu0
    %v1433 = vpop.f32.mrb[0].mxu0
    %v1434 = vpop.f32.mrb[0].mxu0
    %1435 = vdwg.mxu0
    %v1437 = vrot.slane %v1431, 4
    %1438 = vrot.lane.b32.xlu0 %v1437, 64
    %v1439 = vpop.permute.xlu0 %1438
    %v1441 = vadd.f32 %v1182, %v1439
    %v1442 = vmax.f32 %v1441, 0.0
    %v1443 = vpack.c.bf16 %v1442, %v1442
    %v1445 = vrot.slane %v1388, 1
    %v1447 = vsel %vm172, %v1445, 0
    %1449 = vmatprep.subr.bf16.mxu0 0
    %1450 = vmatpush1.bf16.msra.mxu0 %v1217
    %1451 = vmatprep.subr.bf16.mxu0 0
    %1452 = vmatpush1.bf16.msra.mxu0 %v1218
    %1453 = vmatprep.subr.bf16.mxu0 0
    %1454 = vmatpush1.bf16.msra.mxu0 %v1219
    %1455 = vmatprep.subr.bf16.mxu0 0
    %1456 = vmatpush1.bf16.msra.mxu0 %v1220
    %1457 = vmatprep.subr.bf16.mxu0 0
    %1458 = vmatpush1.bf16.msra.mxu0 0
    %1459 = vmatprep.subr.bf16.mxu0 0
    %1460 = vmatpush1.bf16.msra.mxu0 0
    %1461 = vmatprep.subr.bf16.mxu0 0
    %1462 = vmatpush1.bf16.msra.mxu0 0
    %1463 = vmatprep.subr.bf16.mxu0 0
    %1464 = vmatpush1.bf16.msra.mxu0 0
    %1465 = vmatprep.subr.bf16.mxu0 0
    %1466 = vmatpush1.bf16.msra.mxu0 0
    %1467 = vmatprep.subr.bf16.mxu0 0
    %1468 = vmatpush1.bf16.msra.mxu0 0
    %1469 = vmatprep.subr.bf16.mxu0 0
    %1470 = vmatpush1.bf16.msra.mxu0 0
    %1471 = vmatprep.subr.bf16.mxu0 0
    %1472 = vmatpush1.bf16.msra.mxu0 0
    %1473 = vmatprep.subr.bf16.mxu0 0
    %1474 = vmatpush1.bf16.msra.mxu0 0
    %1475 = vmatprep.subr.bf16.mxu0 0
    %1476 = vmatpush1.bf16.msra.mxu0 0
    %1477 = vmatprep.subr.bf16.mxu0 0
    %1478 = vmatpush1.bf16.msra.mxu0 0
    %1479 = vmatprep.subr.bf16.mxu0 0
    %1480 = vmatpush1.bf16.msra.mxu0 0
    %1481 = vmatprep.mubr.bf16.mxu0 0
    %1482 = vmatmul.mubr.bf16.gmra.mrb[0].mxu0 %v1447
    %v1483 = vpop.f32.mrb[0].mxu0
    %v1484 = vadd.f32 0.0, %v1483
    %v1485 = vpop.f32.mrb[0].mxu0
    %v1486 = vpop.f32.mrb[0].mxu0
    %v1487 = vpop.f32.mrb[0].mxu0
    %1488 = vdwg.mxu0
    %v1490 = vrot.slane %v1484, 4
    %v1492 = vadd.f32 %v1179, %v1490
    %v1493 = vmax.f32 %v1492, 0.0
    %v1494 = vpack.c.bf16 %v1493, %v1493
    %v1496 = vrot.slane %v1443, 2
    %1497 = vrot.lane.b32.xlu0 %v1496, 64
    %v1498 = vpop.permute.xlu0 %1497
    %v1500 = vsel %vm172, %v1498, 0
    %1502 = vmatprep.subr.bf16.mxu0 0
    %1503 = vmatpush1.bf16.msra.mxu0 %v1284
    %1504 = vmatprep.subr.bf16.mxu0 0
    %1505 = vmatpush1.bf16.msra.mxu0 %v1285
    %1506 = vmatprep.subr.bf16.mxu0 0
    %1507 = vmatpush1.bf16.msra.mxu0 %v1286
    %1508 = vmatprep.subr.bf16.mxu0 0
    %1509 = vmatpush1.bf16.msra.mxu0 %v1287
    %1510 = vmatprep.subr.bf16.mxu0 0
    %1511 = vmatpush1.bf16.msra.mxu0 0
    %1512 = vmatprep.subr.bf16.mxu0 0
    %1513 = vmatpush1.bf16.msra.mxu0 0
    %1514 = vmatprep.subr.bf16.mxu0 0
    %1515 = vmatpush1.bf16.msra.mxu0 0
    %1516 = vmatprep.subr.bf16.mxu0 0
    %1517 = vmatpush1.bf16.msra.mxu0 0
    %1518 = vmatprep.subr.bf16.mxu0 0
    %1519 = vmatpush1.bf16.msra.mxu0 0
    %1520 = vmatprep.subr.bf16.mxu0 0
    %1521 = vmatpush1.bf16.msra.mxu0 0
    %1522 = vmatprep.subr.bf16.mxu0 0
    %1523 = vmatpush1.bf16.msra.mxu0 0
    %1524 = vmatprep.subr.bf16.mxu0 0
    %1525 = vmatpush1.bf16.msra.mxu0 0
    %1526 = vmatprep.subr.bf16.mxu0 0
    %1527 = vmatpush1.bf16.msra.mxu0 0
    %1528 = vmatprep.subr.bf16.mxu0 0
    %1529 = vmatpush1.bf16.msra.mxu0 0
    %1530 = vmatprep.subr.bf16.mxu0 0
    %1531 = vmatpush1.bf16.msra.mxu0 0
    %1532 = vmatprep.subr.bf16.mxu0 0
    %1533 = vmatpush1.bf16.msra.mxu0 0
    %1534 = vmatprep.mubr.bf16.mxu0 0
    %1535 = vmatmul.mubr.bf16.gmra.mrb[0].mxu0 %v1500
    %v1536 = vpop.f32.mrb[0].mxu0
    %v1537 = vadd.f32 0.0, %v1536
    %v1538 = vpop.f32.mrb[0].mxu0
    %v1539 = vpop.f32.mrb[0].mxu0
    %v1540 = vpop.f32.mrb[0].mxu0
    %1541 = vdwg.mxu0
    %v1543 = vrot.slane %v1537, 6
    %1544 = vrot.lane.b32.xlu0 %v1543, 64
    %v1545 = vpop.permute.xlu0 %1544
    %v1547 = vadd.f32 %v1182, %v1545
    %v1548 = vmax.f32 %v1547, 0.0
    %v1549 = vpack.c.bf16 %v1548, %v1548
    %v1551 = vrot.slane %v1494, 2
    %v1553 = vsel %vm172, %v1551, 0
    %1555 = vmatprep.subr.bf16.mxu0 0
    %1556 = vmatpush1.bf16.msra.mxu0 %v1217
    %1557 = vmatprep.subr.bf16.mxu0 0
    %1558 = vmatpush1.bf16.msra.mxu0 %v1218
    %1559 = vmatprep.subr.bf16.mxu0 0
    %1560 = vmatpush1.bf16.msra.mxu0 %v1219
    %1561 = vmatprep.subr.bf16.mxu0 0
    %1562 = vmatpush1.bf16.msra.mxu0 %v1220
    %1563 = vmatprep.subr.bf16.mxu0 0
    %1564 = vmatpush1.bf16.msra.mxu0 0
    %1565 = vmatprep.subr.bf16.mxu0 0
    %1566 = vmatpush1.bf16.msra.mxu0 0
    %1567 = vmatprep.subr.bf16.mxu0 0
    %1568 = vmatpush1.bf16.msra.mxu0 0
    %1569 = vmatprep.subr.bf16.mxu0 0
    %1570 = vmatpush1.bf16.msra.mxu0 0
    %1571 = vmatprep.subr.bf16.mxu0 0
    %1572 = vmatpush1.bf16.msra.mxu0 0
    %1573 = vmatprep.subr.bf16.mxu0 0
    %1574 = vmatpush1.bf16.msra.mxu0 0
    %1575 = vmatprep.subr.bf16.mxu0 0
    %1576 = vmatpush1.bf16.msra.mxu0 0
    %1577 = vmatprep.subr.bf16.mxu0 0
    %1578 = vmatpush1.bf16.msra.mxu0 0
    %1579 = vmatprep.subr.bf16.mxu0 0
    %1580 = vmatpush1.bf16.msra.mxu0 0
    %1581 = vmatprep.subr.bf16.mxu0 0
    %1582 = vmatpush1.bf16.msra.mxu0 0
    %1583 = vmatprep.subr.bf16.mxu0 0
    %1584 = vmatpush1.bf16.msra.mxu0 0
    %1585 = vmatprep.subr.bf16.mxu0 0
    %1586 = vmatpush1.bf16.msra.mxu0 0
    %1587 = vmatprep.mubr.bf16.mxu0 0
    %1588 = vmatmul.mubr.bf16.gmra.mrb[0].mxu0 %v1553
    %v1589 = vpop.f32.mrb[0].mxu0
    %v1590 = vadd.f32 0.0, %v1589
    %v1591 = vpop.f32.mrb[0].mxu0
    %v1592 = vpop.f32.mrb[0].mxu0
    %v1593 = vpop.f32.mrb[0].mxu0
    %1594 = vdwg.mxu0
    %v1596 = vrot.slane %v1590, 2
    %v1598 = vadd.f32 %v1179, %v1596
    %v1599 = vmax.f32 %v1598, 0.0
    %v1600 = vpack.c.bf16 %v1599, %v1599
    %v1602 = vrot.slane %v1549, 1
    %1603 = vrot.lane.b32.xlu0 %v1602, 64
    %v1604 = vpop.permute.xlu0 %1603
    %v1606 = vsel %vm172, %v1604, 0
    %1608 = vmatprep.subr.bf16.mxu0 0
    %1609 = vmatpush1.bf16.msra.mxu0 %v1284
    %1610 = vmatprep.subr.bf16.mxu0 0
    %1611 = vmatpush1.bf16.msra.mxu0 %v1285
    %1612 = vmatprep.subr.bf16.mxu0 0
    %1613 = vmatpush1.bf16.msra.mxu0 %v1286
    %1614 = vmatprep.subr.bf16.mxu0 0
    %1615 = vmatpush1.bf16.msra.mxu0 %v1287
    %1616 = vmatprep.subr.bf16.mxu0 0
    %1617 = vmatpush1.bf16.msra.mxu0 0
    %1618 = vmatprep.subr.bf16.mxu0 0
    %1619 = vmatpush1.bf16.msra.mxu0 0
    %1620 = vmatprep.subr.bf16.mxu0 0
    %1621 = vmatpush1.bf16.msra.mxu0 0
    %1622 = vmatprep.subr.bf16.mxu0 0
    %1623 = vmatpush1.bf16.msra.mxu0 0
    %1624 = vmatprep.subr.bf16.mxu0 0
    %1625 = vmatpush1.bf16.msra.mxu0 0
    %1626 = vmatprep.subr.bf16.mxu0 0
    %1627 = vmatpush1.bf16.msra.mxu0 0
    %1628 = vmatprep.subr.bf16.mxu0 0
    %1629 = vmatpush1.bf16.msra.mxu0 0
    %1630 = vmatprep.subr.bf16.mxu0 0
    %1631 = vmatpush1.bf16.msra.mxu0 0
    %1632 = vmatprep.subr.bf16.mxu0 0
    %1633 = vmatpush1.bf16.msra.mxu0 0
    %1634 = vmatprep.subr.bf16.mxu0 0
    %1635 = vmatpush1.bf16.msra.mxu0 0
    %1636 = vmatprep.subr.bf16.mxu0 0
    %1637 = vmatpush1.bf16.msra.mxu0 0
    %1638 = vmatprep.subr.bf16.mxu0 0
    %1639 = vmatpush1.bf16.msra.mxu0 0
    %1640 = vmatprep.mubr.bf16.mxu0 0
    %1641 = vmatmul.mubr.bf16.gmra.mrb[0].mxu0 %v1606
    %v1642 = vpop.f32.mrb[0].mxu0
    %v1643 = vadd.f32 0.0, %v1642
    %v1644 = vpop.f32.mrb[0].mxu0
    %v1645 = vpop.f32.mrb[0].mxu0
    %v1646 = vpop.f32.mrb[0].mxu0
    %1647 = vdwg.mxu0
    %1649 = vrot.lane.b32.xlu0 %v1643, 64
    %v1650 = vpop.permute.xlu0 %1649
    %v1652 = vadd.f32 %v1182, %v1650
    %v1653 = vmax.f32 %v1652, 0.0
    %v1654 = vpack.c.bf16 %v1653, %v1653
    %v1656 = vrot.slane %v1600, 3
    %v1658 = vsel %vm172, %v1656, 0
    %1660 = vmatprep.subr.bf16.mxu0 0
    %1661 = vmatpush1.bf16.msra.mxu0 %v1217
    %1662 = vmatprep.subr.bf16.mxu0 0
    %1663 = vmatpush1.bf16.msra.mxu0 %v1218
    %1664 = vmatprep.subr.bf16.mxu0 0
    %1665 = vmatpush1.bf16.msra.mxu0 %v1219
    %1666 = vmatprep.subr.bf16.mxu0 0
    %1667 = vmatpush1.bf16.msra.mxu0 %v1220
    %1668 = vmatprep.subr.bf16.mxu0 0
    %1669 = vmatpush1.bf16.msra.mxu0 0
    %1670 = vmatprep.subr.bf16.mxu0 0
    %1671 = vmatpush1.bf16.msra.mxu0 0
    %1672 = vmatprep.subr.bf16.mxu0 0
    %1673 = vmatpush1.bf16.msra.mxu0 0
    %1674 = vmatprep.subr.bf16.mxu0 0
    %1675 = vmatpush1.bf16.msra.mxu0 0
    %1676 = vmatprep.subr.bf16.mxu0 0
    %1677 = vmatpush1.bf16.msra.mxu0 0
    %1678 = vmatprep.subr.bf16.mxu0 0
    %1679 = vmatpush1.bf16.msra.mxu0 0
    %1680 = vmatprep.subr.bf16.mxu0 0
    %1681 = vmatpush1.bf16.msra.mxu0 0
    %1682 = vmatprep.subr.bf16.mxu0 0
    %1683 = vmatpush1.bf16.msra.mxu0 0
    %1684 = vmatprep.subr.bf16.mxu0 0
    %1685 = vmatpush1.bf16.msra.mxu0 0
    %1686 = vmatprep.subr.bf16.mxu0 0
    %1687 = vmatpush1.bf16.msra.mxu0 0
    %1688 = vmatprep.subr.bf16.mxu0 0
    %1689 = vmatpush1.bf16.msra.mxu0 0
    %1690 = vmatprep.subr.bf16.mxu0 0
    %1691 = vmatpush1.bf16.msra.mxu0 0
    %1692 = vmatprep.mubr.bf16.mxu0 0
    %1693 = vmatmul.mubr.bf16.gmra.mrb[0].mxu0 %v1658
    %v1694 = vpop.f32.mrb[0].mxu0
    %v1695 = vadd.f32 0.0, %v1694
    %v1696 = vpop.f32.mrb[0].mxu0
    %v1697 = vpop.f32.mrb[0].mxu0
    %v1698 = vpop.f32.mrb[0].mxu0
    %1699 = vdwg.mxu0
    %v1700 = vadd.f32 %v1182, %v1695
    %v1701 = vmax.f32 %v1700, 0.0
    %v1702 = vpack.c.bf16 %v1701, %v1701
    %1704 = vrot.lane.b32.xlu0 %v1654, 64
    %v1705 = vpop.permute.xlu0 %1704
    %v1707 = vsel %vm172, %v1705, 0
    %1709 = vmatprep.subr.bf16.mxu0 0
    %1710 = vmatpush1.bf16.msra.mxu0 %v1284
    %1711 = vmatprep.subr.bf16.mxu0 0
    %1712 = vmatpush1.bf16.msra.mxu0 %v1285
    %1713 = vmatprep.subr.bf16.mxu0 0
    %1714 = vmatpush1.bf16.msra.mxu0 %v1286
    %1715 = vmatprep.subr.bf16.mxu0 0
    %1716 = vmatpush1.bf16.msra.mxu0 %v1287
    %1717 = vmatprep.subr.bf16.mxu0 0
    %1718 = vmatpush1.bf16.msra.mxu0 0
    %1719 = vmatprep.subr.bf16.mxu0 0
    %1720 = vmatpush1.bf16.msra.mxu0 0
    %1721 = vmatprep.subr.bf16.mxu0 0
    %1722 = vmatpush1.bf16.msra.mxu0 0
    %1723 = vmatprep.subr.bf16.mxu0 0
    %1724 = vmatpush1.bf16.msra.mxu0 0
    %1725 = vmatprep.subr.bf16.mxu0 0
    %1726 = vmatpush1.bf16.msra.mxu0 0
    %1727 = vmatprep.subr.bf16.mxu0 0
    %1728 = vmatpush1.bf16.msra.mxu0 0
    %1729 = vmatprep.subr.bf16.mxu0 0
    %1730 = vmatpush1.bf16.msra.mxu0 0
    %1731 = vmatprep.subr.bf16.mxu0 0
    %1732 = vmatpush1.bf16.msra.mxu0 0
    %1733 = vmatprep.subr.bf16.mxu0 0
    %1734 = vmatpush1.bf16.msra.mxu0 0
    %1735 = vmatprep.subr.bf16.mxu0 0
    %1736 = vmatpush1.bf16.msra.mxu0 0
    %1737 = vmatprep.subr.bf16.mxu0 0
    %1738 = vmatpush1.bf16.msra.mxu0 0
    %1739 = vmatprep.subr.bf16.mxu0 0
    %1740 = vmatpush1.bf16.msra.mxu0 0
    %1741 = vmatprep.mubr.bf16.mxu0 0
    %1742 = vmatmul.mubr.bf16.gmra.mrb[0].mxu0 %v1707
    %v1743 = vpop.f32.mrb[0].mxu0
    %v1744 = vadd.f32 0.0, %v1743
    %v1745 = vpop.f32.mrb[0].mxu0
    %v1746 = vpop.f32.mrb[0].mxu0
    %v1747 = vpop.f32.mrb[0].mxu0
    %1748 = vdwg.mxu0
    %v1750 = vrot.slane %v1744, 2
    %1751 = vrot.lane.b32.xlu0 %v1750, 64
    %v1752 = vpop.permute.xlu0 %1751
    %v1754 = vadd.f32 %v1179, %v1752
    %v1755 = vmax.f32 %v1754, 0.0
    %v1756 = vpack.c.bf16 %v1755, %v1755
    %v1758 = vsel %vm172, %v1702, 0
    %1760 = vmatprep.subr.bf16.mxu0 0
    %1761 = vmatpush1.bf16.msra.mxu0 %v1217
    %1762 = vmatprep.subr.bf16.mxu0 0
    %1763 = vmatpush1.bf16.msra.mxu0 %v1218
    %1764 = vmatprep.subr.bf16.mxu0 0
    %1765 = vmatpush1.bf16.msra.mxu0 %v1219
    %1766 = vmatprep.subr.bf16.mxu0 0
    %1767 = vmatpush1.bf16.msra.mxu0 %v1220
    %1768 = vmatprep.subr.bf16.mxu0 0
    %1769 = vmatpush1.bf16.msra.mxu0 0
    %1770 = vmatprep.subr.bf16.mxu0 0
    %1771 = vmatpush1.bf16.msra.mxu0 0
    %1772 = vmatprep.subr.bf16.mxu0 0
    %1773 = vmatpush1.bf16.msra.mxu0 0
    %1774 = vmatprep.subr.bf16.mxu0 0
    %1775 = vmatpush1.bf16.msra.mxu0 0
    %1776 = vmatprep.subr.bf16.mxu0 0
    %1777 = vmatpush1.bf16.msra.mxu0 0
    %1778 = vmatprep.subr.bf16.mxu0 0
    %1779 = vmatpush1.bf16.msra.mxu0 0
    %1780 = vmatprep.subr.bf16.mxu0 0
    %1781 = vmatpush1.bf16.msra.mxu0 0
    %1782 = vmatprep.subr.bf16.mxu0 0
    %1783 = vmatpush1.bf16.msra.mxu0 0
    %1784 = vmatprep.subr.bf16.mxu0 0
    %1785 = vmatpush1.bf16.msra.mxu0 0
    %1786 = vmatprep.subr.bf16.mxu0 0
    %1787 = vmatpush1.bf16.msra.mxu0 0
    %1788 = vmatprep.subr.bf16.mxu0 0
    %1789 = vmatpush1.bf16.msra.mxu0 0
    %1790 = vmatprep.subr.bf16.mxu0 0
    %1791 = vmatpush1.bf16.msra.mxu0 0
    %1792 = vmatprep.mubr.bf16.mxu0 0
    %1793 = vmatmul.mubr.bf16.gmra.mrb[0].mxu0 %v1758
    %v1794 = vpop.f32.mrb[0].mxu0
    %v1795 = vadd.f32 0.0, %v1794
    %v1796 = vpop.f32.mrb[0].mxu0
    %v1797 = vpop.f32.mrb[0].mxu0
    %v1798 = vpop.f32.mrb[0].mxu0
    %1799 = vdwg.mxu0
    %v1801 = vrot.slane %v1795, 6
    %v1803 = vadd.f32 %v1182, %v1801
    %v1804 = vmax.f32 %v1803, 0.0
    %v1805 = vpack.c.bf16 %v1804, %v1804
    %v1807 = vrot.slane %v1756, 3
    %1808 = vrot.lane.b32.xlu0 %v1807, 64
    %v1809 = vpop.permute.xlu0 %1808
    %v1811 = vsel %vm172, %v1809, 0
    %1813 = vmatprep.subr.bf16.mxu0 0
    %1814 = vmatpush1.bf16.msra.mxu0 %v1284
    %1815 = vmatprep.subr.bf16.mxu0 0
    %1816 = vmatpush1.bf16.msra.mxu0 %v1285
    %1817 = vmatprep.subr.bf16.mxu0 0
    %1818 = vmatpush1.bf16.msra.mxu0 %v1286
    %1819 = vmatprep.subr.bf16.mxu0 0
    %1820 = vmatpush1.bf16.msra.mxu0 %v1287
    %1821 = vmatprep.subr.bf16.mxu0 0
    %1822 = vmatpush1.bf16.msra.mxu0 0
    %1823 = vmatprep.subr.bf16.mxu0 0
    %1824 = vmatpush1.bf16.msra.mxu0 0
    %1825 = vmatprep.subr.bf16.mxu0 0
    %1826 = vmatpush1.bf16.msra.mxu0 0
    %1827 = vmatprep.subr.bf16.mxu0 0
    %1828 = vmatpush1.bf16.msra.mxu0 0
    %1829 = vmatprep.subr.bf16.mxu0 0
    %1830 = vmatpush1.bf16.msra.mxu0 0
    %1831 = vmatprep.subr.bf16.mxu0 0
    %1832 = vmatpush1.bf16.msra.mxu0 0
    %1833 = vmatprep.subr.bf16.mxu0 0
    %1834 = vmatpush1.bf16.msra.mxu0 0
    %1835 = vmatprep.subr.bf16.mxu0 0
    %1836 = vmatpush1.bf16.msra.mxu0 0
    %1837 = vmatprep.subr.bf16.mxu0 0
    %1838 = vmatpush1.bf16.msra.mxu0 0
    %1839 = vmatprep.subr.bf16.mxu0 0
    %1840 = vmatpush1.bf16.msra.mxu0 0
    %1841 = vmatprep.subr.bf16.mxu0 0
    %1842 = vmatpush1.bf16.msra.mxu0 0
    %1843 = vmatprep.subr.bf16.mxu0 0
    %1844 = vmatpush1.bf16.msra.mxu0 0
    %1845 = vmatprep.mubr.bf16.mxu0 0
    %1846 = vmatmul.mubr.bf16.gmra.mrb[0].mxu0 %v1811
    %v1847 = vpop.f32.mrb[0].mxu0
    %v1848 = vadd.f32 0.0, %v1847
    %v1849 = vpop.f32.mrb[0].mxu0
    %v1850 = vpop.f32.mrb[0].mxu0
    %v1851 = vpop.f32.mrb[0].mxu0
    %1852 = vdwg.mxu0
    %v1854 = vrot.slane %v1848, 4
    %1855 = vrot.lane.b32.xlu0 %v1854, 64
    %v1856 = vpop.permute.xlu0 %1855
    %v1858 = vadd.f32 %v1179, %v1856
    %v1859 = vmax.f32 %v1858, 0.0
    %v1860 = vpack.c.bf16 %v1859, %v1859
    %v1862 = vrot.slane %v1805, 1
    %v1864 = vsel %vm172, %v1862, 0
    %1866 = vmatprep.subr.bf16.mxu0 0
    %1867 = vmatpush1.bf16.msra.mxu0 %v1217
    %1868 = vmatprep.subr.bf16.mxu0 0
    %1869 = vmatpush1.bf16.msra.mxu0 %v1218
    %1870 = vmatprep.subr.bf16.mxu0 0
    %1871 = vmatpush1.bf16.msra.mxu0 %v1219
    %1872 = vmatprep.subr.bf16.mxu0 0
    %1873 = vmatpush1.bf16.msra.mxu0 %v1220
    %1874 = vmatprep.subr.bf16.mxu0 0
    %1875 = vmatpush1.bf16.msra.mxu0 0
    %1876 = vmatprep.subr.bf16.mxu0 0
    %1877 = vmatpush1.bf16.msra.mxu0 0
    %1878 = vmatprep.subr.bf16.mxu0 0
    %1879 = vmatpush1.bf16.msra.mxu0 0
    %1880 = vmatprep.subr.bf16.mxu0 0
    %1881 = vmatpush1.bf16.msra.mxu0 0
    %1882 = vmatprep.subr.bf16.mxu0 0
    %1883 = vmatpush1.bf16.msra.mxu0 0
    %1884 = vmatprep.subr.bf16.mxu0 0
    %1885 = vmatpush1.bf16.msra.mxu0 0
    %1886 = vmatprep.subr.bf16.mxu0 0
    %1887 = vmatpush1.bf16.msra.mxu0 0
    %1888 = vmatprep.subr.bf16.mxu0 0
    %1889 = vmatpush1.bf16.msra.mxu0 0
    %1890 = vmatprep.subr.bf16.mxu0 0
    %1891 = vmatpush1.bf16.msra.mxu0 0
    %1892 = vmatprep.subr.bf16.mxu0 0
    %1893 = vmatpush1.bf16.msra.mxu0 0
    %1894 = vmatprep.subr.bf16.mxu0 0
    %1895 = vmatpush1.bf16.msra.mxu0 0
    %1896 = vmatprep.subr.bf16.mxu0 0
    %1897 = vmatpush1.bf16.msra.mxu0 0
    %1898 = vmatprep.mubr.bf16.mxu0 0
    %1899 = vmatmul.mubr.bf16.gmra.mrb[0].mxu0 %v1864
    %v1900 = vpop.f32.mrb[0].mxu0
    %v1901 = vadd.f32 0.0, %v1900
    %v1902 = vpop.f32.mrb[0].mxu0
    %v1903 = vpop.f32.mrb[0].mxu0
    %v1904 = vpop.f32.mrb[0].mxu0
    %1905 = vdwg.mxu0
    %v1907 = vrot.slane %v1901, 4
    %v1909 = vadd.f32 %v1182, %v1907
    %v1910 = vmax.f32 %v1909, 0.0
    %v1911 = vpack.c.bf16 %v1910, %v1910
    %v1913 = vrot.slane %v1860, 2
    %1914 = vrot.lane.b32.xlu0 %v1913, 64
    %v1915 = vpop.permute.xlu0 %1914
    %v1917 = vsel %vm172, %v1915, 0
    %1919 = vmatprep.subr.bf16.mxu0 0
    %1920 = vmatpush1.bf16.msra.mxu0 %v1284
    %1921 = vmatprep.subr.bf16.mxu0 0
    %1922 = vmatpush1.bf16.msra.mxu0 %v1285
    %1923 = vmatprep.subr.bf16.mxu0 0
    %1924 = vmatpush1.bf16.msra.mxu0 %v1286
    %1925 = vmatprep.subr.bf16.mxu0 0
    %1926 = vmatpush1.bf16.msra.mxu0 %v1287
    %1927 = vmatprep.subr.bf16.mxu0 0
    %1928 = vmatpush1.bf16.msra.mxu0 0
    %1929 = vmatprep.subr.bf16.mxu0 0
    %1930 = vmatpush1.bf16.msra.mxu0 0
    %1931 = vmatprep.subr.bf16.mxu0 0
    %1932 = vmatpush1.bf16.msra.mxu0 0
    %1933 = vmatprep.subr.bf16.mxu0 0
    %1934 = vmatpush1.bf16.msra.mxu0 0
    %1935 = vmatprep.subr.bf16.mxu0 0
    %1936 = vmatpush1.bf16.msra.mxu0 0
    %1937 = vmatprep.subr.bf16.mxu0 0
    %1938 = vmatpush1.bf16.msra.mxu0 0
    %1939 = vmatprep.subr.bf16.mxu0 0
    %1940 = vmatpush1.bf16.msra.mxu0 0
    %1941 = vmatprep.subr.bf16.mxu0 0
    %1942 = vmatpush1.bf16.msra.mxu0 0
    %1943 = vmatprep.subr.bf16.mxu0 0
    %1944 = vmatpush1.bf16.msra.mxu0 0
    %1945 = vmatprep.subr.bf16.mxu0 0
    %1946 = vmatpush1.bf16.msra.mxu0 0
    %1947 = vmatprep.subr.bf16.mxu0 0
    %1948 = vmatpush1.bf16.msra.mxu0 0
    %1949 = vmatprep.subr.bf16.mxu0 0
    %1950 = vmatpush1.bf16.msra.mxu0 0
    %1951 = vmatprep.mubr.bf16.mxu0 0
    %1952 = vmatmul.mubr.bf16.gmra.mrb[0].mxu0 %v1917
    %v1953 = vpop.f32.mrb[0].mxu0
    %v1954 = vadd.f32 0.0, %v1953
    %v1955 = vpop.f32.mrb[0].mxu0
    %v1956 = vpop.f32.mrb[0].mxu0
    %v1957 = vpop.f32.mrb[0].mxu0
    %1958 = vdwg.mxu0
    %v1960 = vrot.slane %v1954, 6
    %1961 = vrot.lane.b32.xlu0 %v1960, 64
    %v1962 = vpop.permute.xlu0 %1961
    %v1964 = vadd.f32 %v1179, %v1962
    %v1965 = vmax.f32 %v1964, 0.0
    %v1966 = vpack.c.bf16 %v1965, %v1965
    %v1968 = vrot.slane %v1911, 2
    %v1970 = vsel %vm172, %v1968, 0
    %1972 = vmatprep.subr.bf16.mxu0 0
    %1973 = vmatpush1.bf16.msra.mxu0 %v1217
    %1974 = vmatprep.subr.bf16.mxu0 0
    %1975 = vmatpush1.bf16.msra.mxu0 %v1218
    %1976 = vmatprep.subr.bf16.mxu0 0
    %1977 = vmatpush1.bf16.msra.mxu0 %v1219
    %1978 = vmatprep.subr.bf16.mxu0 0
    %1979 = vmatpush1.bf16.msra.mxu0 %v1220
    %1980 = vmatprep.subr.bf16.mxu0 0
    %1981 = vmatpush1.bf16.msra.mxu0 0
    %1982 = vmatprep.subr.bf16.mxu0 0
    %1983 = vmatpush1.bf16.msra.mxu0 0
    %1984 = vmatprep.subr.bf16.mxu0 0
    %1985 = vmatpush1.bf16.msra.mxu0 0
    %1986 = vmatprep.subr.bf16.mxu0 0
    %1987 = vmatpush1.bf16.msra.mxu0 0
    %1988 = vmatprep.subr.bf16.mxu0 0
    %1989 = vmatpush1.bf16.msra.mxu0 0
    %1990 = vmatprep.subr.bf16.mxu0 0
    %1991 = vmatpush1.bf16.msra.mxu0 0
    %1992 = vmatprep.subr.bf16.mxu0 0
    %1993 = vmatpush1.bf16.msra.mxu0 0
    %1994 = vmatprep.subr.bf16.mxu0 0
    %1995 = vmatpush1.bf16.msra.mxu0 0
    %1996 = vmatprep.subr.bf16.mxu0 0
    %1997 = vmatpush1.bf16.msra.mxu0 0
    %1998 = vmatprep.subr.bf16.mxu0 0
    %1999 = vmatpush1.bf16.msra.mxu0 0
    %2000 = vmatprep.subr.bf16.mxu0 0
    %2001 = vmatpush1.bf16.msra.mxu0 0
    %2002 = vmatprep.subr.bf16.mxu0 0
    %2003 = vmatpush1.bf16.msra.mxu0 0
    %2004 = vmatprep.mubr.bf16.mxu0 0
    %2005 = vmatmul.mubr.bf16.gmra.mrb[0].mxu0 %v1970
    %v2006 = vpop.f32.mrb[0].mxu0
    %v2007 = vadd.f32 0.0, %v2006
    %v2008 = vpop.f32.mrb[0].mxu0
    %v2009 = vpop.f32.mrb[0].mxu0
    %v2010 = vpop.f32.mrb[0].mxu0
    %2011 = vdwg.mxu0
    %v2013 = vrot.slane %v2007, 2
    %v2015 = vadd.f32 %v1182, %v2013
    %v2016 = vmax.f32 %v2015, 0.0
    %v2017 = vpack.c.bf16 %v2016, %v2016
    %v2019 = vrot.slane %v1966, 1
    %2020 = vrot.lane.b32.xlu0 %v2019, 64
    %v2021 = vpop.permute.xlu0 %2020
    %v2023 = vsel %vm172, %v2021, 0
    %2025 = vmatprep.subr.bf16.mxu0 0
    %2026 = vmatpush1.bf16.msra.mxu0 %v1284
    %2027 = vmatprep.subr.bf16.mxu0 0
    %2028 = vmatpush1.bf16.msra.mxu0 %v1285
    %2029 = vmatprep.subr.bf16.mxu0 0
    %2030 = vmatpush1.bf16.msra.mxu0 %v1286
    %2031 = vmatprep.subr.bf16.mxu0 0
    %2032 = vmatpush1.bf16.msra.mxu0 %v1287
    %2033 = vmatprep.subr.bf16.mxu0 0
    %2034 = vmatpush1.bf16.msra.mxu0 0
    %2035 = vmatprep.subr.bf16.mxu0 0
    %2036 = vmatpush1.bf16.msra.mxu0 0
    %2037 = vmatprep.subr.bf16.mxu0 0
    %2038 = vmatpush1.bf16.msra.mxu0 0
    %2039 = vmatprep.subr.bf16.mxu0 0
    %2040 = vmatpush1.bf16.msra.mxu0 0
    %2041 = vmatprep.subr.bf16.mxu0 0
    %2042 = vmatpush1.bf16.msra.mxu0 0
    %2043 = vmatprep.subr.bf16.mxu0 0
    %2044 = vmatpush1.bf16.msra.mxu0 0
    %2045 = vmatprep.subr.bf16.mxu0 0
    %2046 = vmatpush1.bf16.msra.mxu0 0
    %2047 = vmatprep.subr.bf16.mxu0 0
    %2048 = vmatpush1.bf16.msra.mxu0 0
    %2049 = vmatprep.subr.bf16.mxu0 0
    %2050 = vmatpush1.bf16.msra.mxu0 0
    %2051 = vmatprep.subr.bf16.mxu0 0
    %2052 = vmatpush1.bf16.msra.mxu0 0
    %2053 = vmatprep.subr.bf16.mxu0 0
    %2054 = vmatpush1.bf16.msra.mxu0 0
    %2055 = vmatprep.subr.bf16.mxu0 0
    %2056 = vmatpush1.bf16.msra.mxu0 0
    %2057 = vmatprep.mubr.bf16.mxu0 0
    %2058 = vmatmul.mubr.bf16.gmra.mrb[0].mxu0 %v2023
    %v2059 = vpop.f32.mrb[0].mxu0
    %v2060 = vadd.f32 0.0, %v2059
    %v2061 = vpop.f32.mrb[0].mxu0
    %v2062 = vpop.f32.mrb[0].mxu0
    %v2063 = vpop.f32.mrb[0].mxu0
    %2064 = vdwg.mxu0
    %2066 = vrot.lane.b32.xlu0 %v2060, 64
    %v2067 = vpop.permute.xlu0 %2066
    %v2069 = vadd.f32 %v1179, %v2067
    %v2070 = vmax.f32 %v2069, 0.0
    %v2071 = vpack.c.bf16 %v2070, %v2070
    %v2073 = vrot.slane %v2071, 5
    %v2076 = vsel %vm172, %v2017, %v2073
    %v2077 = vld [vmem:[%s9] sm:$0xf]
    %v2078 = vld [vmem:[%s9 + $0x4] sm:$0xf]
    %v2079 = vld [vmem:[%s9 + $0x8] sm:$0xf]
    %v2080 = vld [vmem:[%s9 + $0xc] sm:$0xf]
    %v2081 = vld [vmem:[%s9 + $0x10] sm:$0xf]
    %v2082 = vld [vmem:[%s9 + $0x14] sm:$0xf]
    %v2083 = vld [vmem:[%s9 + $0x18] sm:$0xf]
    %v2084 = vld [vmem:[%s9 + $0x1c] sm:$0xf]
    %v2085 = vld [vmem:[%s9 + $0x20] sm:$0xf]
    %v2086 = vld [vmem:[%s9 + $0x24] sm:$0xf]
    %v2087 = vld [vmem:[%s9 + $0x28] sm:$0xf]
    %v2088 = vld [vmem:[%s9 + $0x2c] sm:$0xf]
    %v2089 = vld [vmem:[%s9 + $0x30] sm:$0xf]
    %v2090 = vld [vmem:[%s9 + $0x34] sm:$0xf]
    %v2091 = vld [vmem:[%s9 + $0x38] sm:$0xf]
    %v2092 = vld [vmem:[%s9 + $0x3c] sm:$0xf]
    %v2093 = vld [vmem:[%s10] sm:$0x1]
    %v2094 = vunpack.c.l.bf16 %v2093
    %v2095 = vlaneseq
    %v2096 = vshrl.u32 %v2095, 7
    %v2097 = vsub.s32 0, %v2096
    %v2098 = vrot.slane %v2094, %v2097
    %v2100 = vrot.slane %v2076, 3
    %v2118 = vunpack.c.l.b16 %v2077
    %v2119 = vunpack.c.l.b16 %v2078
    %v2120 = vunpack.c.l.b16 %v2079
    %v2121 = vunpack.c.l.b16 %v2080
    %v2122 = vunpack.c.l.b16 %v2081
    %v2123 = vunpack.c.l.b16 %v2082
    %v2124 = vunpack.c.l.b16 %v2083
    %v2125 = vunpack.c.l.b16 %v2084
    %v2126 = vunpack.c.l.b16 %v2085
    %v2127 = vunpack.c.l.b16 %v2086
    %v2128 = vunpack.c.l.b16 %v2087
    %v2129 = vunpack.c.l.b16 %v2088
    %v2130 = vunpack.c.l.b16 %v2089
    %v2131 = vunpack.c.l.b16 %v2090
    %v2132 = vunpack.c.l.b16 %v2091
    %v2133 = vunpack.c.l.b16 %v2092
    %v2134 = vpack.c.b16 %v2119, %v2118
    %v2135 = vpack.c.b16 %v2121, %v2120
    %v2136 = vpack.c.b16 %v2123, %v2122
    %v2137 = vpack.c.b16 %v2125, %v2124
    %v2138 = vpack.c.b16 %v2127, %v2126
    %v2139 = vpack.c.b16 %v2129, %v2128
    %v2140 = vpack.c.b16 %v2131, %v2130
    %v2141 = vpack.c.b16 %v2133, %v2132
    %2150 = vmatprep.subr.bf16.mxu0 0
    %2151 = vmatpush1.bf16.msra.mxu0 %v2134
    %2152 = vmatprep.subr.bf16.mxu0 0
    %2153 = vmatpush1.bf16.msra.mxu0 %v2135
    %2154 = vmatprep.subr.bf16.mxu0 0
    %2155 = vmatpush1.bf16.msra.mxu0 %v2136
    %2156 = vmatprep.subr.bf16.mxu0 0
    %2157 = vmatpush1.bf16.msra.mxu0 %v2137
    %2158 = vmatprep.subr.bf16.mxu0 0
    %2159 = vmatpush1.bf16.msra.mxu0 %v2138
    %2160 = vmatprep.subr.bf16.mxu0 0
    %2161 = vmatpush1.bf16.msra.mxu0 %v2139
    %2162 = vmatprep.subr.bf16.mxu0 0
    %2163 = vmatpush1.bf16.msra.mxu0 %v2140
    %2164 = vmatprep.subr.bf16.mxu0 0
    %2165 = vmatpush1.bf16.msra.mxu0 %v2141
    %2166 = vmatprep.subr.bf16.mxu0 0
    %2167 = vmatpush1.bf16.msra.mxu0 0
    %2168 = vmatprep.subr.bf16.mxu0 0
    %2169 = vmatpush1.bf16.msra.mxu0 0
    %2170 = vmatprep.subr.bf16.mxu0 0
    %2171 = vmatpush1.bf16.msra.mxu0 0
    %2172 = vmatprep.subr.bf16.mxu0 0
    %2173 = vmatpush1.bf16.msra.mxu0 0
    %2174 = vmatprep.subr.bf16.mxu0 0
    %2175 = vmatpush1.bf16.msra.mxu0 0
    %2176 = vmatprep.subr.bf16.mxu0 0
    %2177 = vmatpush1.bf16.msra.mxu0 0
    %2178 = vmatprep.subr.bf16.mxu0 0
    %2179 = vmatpush1.bf16.msra.mxu0 0
    %2180 = vmatprep.subr.bf16.mxu0 0
    %2181 = vmatpush1.bf16.msra.mxu0 0
    %2182 = vmatprep.mubr.bf16.mxu0 0
    %2183 = vmatmul.mubr.bf16.gmra.mrb[0].mxu0 %v2100
    %v2184 = vpop.f32.mrb[0].mxu0
    %v2185 = vadd.f32 %v2098, %v2184
    %v2186 = vpop.f32.mrb[0].mxu0
    %v2187 = vpop.f32.mrb[0].mxu0
    %v2188 = vpop.f32.mrb[0].mxu0
    %2189 = vdwg.mxu0
    %vm2190 = vcmask 517120
    %v2191 = vsel %vm2190, %v2185, 0.0
    %2192 = vadd.xlane.f32.xlu0 %v2191
    %v2193 = vpop.xlane.xlu0 %2192
    %v2194 = vrcp.pop 64.0
    %v2195 = vmul.f32 %v2193, %v2194
    %v2196 = vsub.f32 %v2185, %v2195
    %v2197 = vmul.f32 %v2196, %v2196
    %v2198 = vsel %vm2190, %v2197, 0.0
    %2199 = vadd.xlane.f32.xlu0 %v2198
    %v2200 = vpop.xlane.xlu0 %2199
    %v2201 = vmul.f32 %v2200, %v2194
    %v2202 = vadd.f32 %v2201, 1e-05
    %v2203 = vrsqrt.pop %v2202
    %v2204 = vmul.f32 %v2196, %v2203
    %v2205 = vld [vmem:[%s11] sm:$0x1]
    %v2206 = vunpack.c.l.bf16 %v2205
    %v2207 = vlaneseq
    %v2208 = vshrl.u32 %v2207, 7
    %v2209 = vsub.s32 0, %v2208
    %v2210 = vrot.slane %v2206, %v2209
    %v2211 = vmul.f32 %v2204, %v2210
    %v2212 = vld [vmem:[%s12] sm:$0x1]
    %v2213 = vunpack.c.l.bf16 %v2212
    %v2214 = vlaneseq
    %v2215 = vshrl.u32 %v2214, 7
    %v2216 = vsub.s32 0, %v2215
    %v2217 = vrot.slane %v2213, %v2216
    %v2218 = vadd.f32 %v2211, %v2217
    %v2219 = vmax.f32 %v2218, 0.0
    %v2220 = vpack.c.bf16 %v2219, %v2219
    %v2221 = vld [vmem:[%s13] sm:$0xf]
    %v2222 = vld [vmem:[%s13 + $0x4] sm:$0xf]
    %v2223 = vld [vmem:[%s13 + $0x8] sm:$0xf]
    %v2224 = vld [vmem:[%s13 + $0xc] sm:$0xf]
    %v2225 = vld [vmem:[%s13 + $0x10] sm:$0xf]
    %v2226 = vld [vmem:[%s13 + $0x14] sm:$0xf]
    %v2227 = vld [vmem:[%s13 + $0x18] sm:$0xf]
    %v2228 = vld [vmem:[%s13 + $0x1c] sm:$0xf]
    %v2229 = vld [vmem:[%s14] sm:$0x1]
    %v2230 = vunpack.c.l.bf16 %v2229
    %v2231 = vlaneseq
    %v2232 = vshrl.u32 %v2231, 7
    %v2233 = vsub.s32 0, %v2232
    %v2234 = vrot.slane %v2230, %v2233
    %v2243 = vunpack.c.l.b16 %v2221
    %v2244 = vunpack.c.l.b16 %v2222
    %v2245 = vunpack.c.l.b16 %v2223
    %v2246 = vunpack.c.l.b16 %v2224
    %v2247 = vunpack.c.l.b16 %v2225
    %v2248 = vunpack.c.l.b16 %v2226
    %v2249 = vunpack.c.l.b16 %v2227
    %v2250 = vunpack.c.l.b16 %v2228
    %v2251 = vpack.c.b16 %v2244, %v2243
    %v2252 = vpack.c.b16 %v2246, %v2245
    %v2253 = vpack.c.b16 %v2248, %v2247
    %v2254 = vpack.c.b16 %v2250, %v2249
    %v2260 = vsel %vm172, %v2220, 0
    %2262 = vmatprep.subr.bf16.mxu0 0
    %2263 = vmatpush1.bf16.msra.mxu0 %v2251
    %2264 = vmatprep.subr.bf16.mxu0 0
    %2265 = vmatpush1.bf16.msra.mxu0 %v2252
    %2266 = vmatprep.subr.bf16.mxu0 0
    %2267 = vmatpush1.bf16.msra.mxu0 %v2253
    %2268 = vmatprep.subr.bf16.mxu0 0
    %2269 = vmatpush1.bf16.msra.mxu0 %v2254
    %2270 = vmatprep.subr.bf16.mxu0 0
    %2271 = vmatpush1.bf16.msra.mxu0 0
    %2272 = vmatprep.subr.bf16.mxu0 0
    %2273 = vmatpush1.bf16.msra.mxu0 0
    %2274 = vmatprep.subr.bf16.mxu0 0
    %2275 = vmatpush1.bf16.msra.mxu0 0
    %2276 = vmatprep.subr.bf16.mxu0 0
    %2277 = vmatpush1.bf16.msra.mxu0 0
    %2278 = vmatprep.subr.bf16.mxu0 0
    %2279 = vmatpush1.bf16.msra.mxu0 0
    %2280 = vmatprep.subr.bf16.mxu0 0
    %2281 = vmatpush1.bf16.msra.mxu0 0
    %2282 = vmatprep.subr.bf16.mxu0 0
    %2283 = vmatpush1.bf16.msra.mxu0 0
    %2284 = vmatprep.subr.bf16.mxu0 0
    %2285 = vmatpush1.bf16.msra.mxu0 0
    %2286 = vmatprep.subr.bf16.mxu0 0
    %2287 = vmatpush1.bf16.msra.mxu0 0
    %2288 = vmatprep.subr.bf16.mxu0 0
    %2289 = vmatpush1.bf16.msra.mxu0 0
    %2290 = vmatprep.subr.bf16.mxu0 0
    %2291 = vmatpush1.bf16.msra.mxu0 0
    %2292 = vmatprep.subr.bf16.mxu0 0
    %2293 = vmatpush1.bf16.msra.mxu0 0
    %2294 = vmatprep.mubr.bf16.mxu0 0
    %2295 = vmatmul.mubr.bf16.gmra.mrb[0].mxu0 %v2260
    %v2296 = vpop.f32.mrb[0].mxu0
    %v2297 = vadd.f32 %v2234, %v2296
    %v2298 = vpop.f32.mrb[0].mxu0
    %v2299 = vpop.f32.mrb[0].mxu0
    %v2300 = vpop.f32.mrb[0].mxu0
    %2301 = vdwg.mxu0
    %vm2302 = vcmask 254976
    %v2303 = vsel %vm2302, %v2297, 0.0
    %2304 = vadd.xlane.f32.xlu0 %v2303
    %v2305 = vpop.xlane.xlu0 %2304
    %v2306 = vrcp.pop 32.0
    %v2307 = vmul.f32 %v2305, %v2306
    %v2308 = vsub.f32 %v2297, %v2307
    %v2309 = vmul.f32 %v2308, %v2308
    %v2310 = vsel %vm2302, %v2309, 0.0
    %2311 = vadd.xlane.f32.xlu0 %v2310
    %v2312 = vpop.xlane.xlu0 %2311
    %v2313 = vmul.f32 %v2312, %v2306
    %v2314 = vadd.f32 %v2313, 1e-05
    %v2315 = vrsqrt.pop %v2314
    %v2316 = vmul.f32 %v2308, %v2315
    %v2317 = vld [vmem:[%s15] sm:$0x1]
    %v2318 = vunpack.c.l.bf16 %v2317
    %v2319 = vlaneseq
    %v2320 = vshrl.u32 %v2319, 7
    %v2321 = vsub.s32 0, %v2320
    %v2322 = vrot.slane %v2318, %v2321
    %v2323 = vmul.f32 %v2316, %v2322
    %v2324 = vld [vmem:[%s16] sm:$0x1]
    %v2325 = vunpack.c.l.bf16 %v2324
    %v2326 = vlaneseq
    %v2327 = vshrl.u32 %v2326, 7
    %v2328 = vsub.s32 0, %v2327
    %v2329 = vrot.slane %v2325, %v2328
    %v2330 = vadd.f32 %v2323, %v2329
    %v2331 = vpack.c.bf16 %v2330, %v2330
    %vm2332 = vcmask 253952
    %2333 = vst.msk [vmem:[#allocation3] sm:$0x1] %vm2332, %v2331
    // Predicated region
    $region70: #{rnn_hypertoken_encoder.1} parent=1 // pred_check
      _
    $region71: #{rnn_hypertoken_encoder.1} parent=1 // pred_check_branch
      %2335 = sbr.rel (0) target = $region73
    $region72: #{rnn_hypertoken_encoder.1} parent=1 // pred_region
      %s2337 = ssub.s32 16, 16
      %2338 = vsyncadd [#allocation4], %s2337
      %s2340 = sshll.u32 [#allocation3], 4
      %s2341 = int_to_ptr.vmem [resolvable:$true] %s2340
      %2343 = dma.vmem_to_hbm [thread:$0]  %s2341, 16, %s17, [#allocation4]
    $region73: #{rnn_hypertoken_encoder.1} parent=1 // pred_fallthru
      _
    // Predicated region
    $region74: #{rnn_hypertoken_encoder.1} parent=1 // pred_check
      _
    $region75: #{rnn_hypertoken_encoder.1} parent=1 // pred_check_branch
      %2345 = sbr.rel (0) target = $region77
    $region76: #{rnn_hypertoken_encoder.1} parent=1 // pred_region
      %2346 = dma.done [#allocation4], 16
    $region77: #{rnn_hypertoken_encoder.1} parent=1 // pred_fallthru
      _
    %2347 = vsyncpa [#allocation4], 1

</llo_original>
